<compile_context>
chip_gen: v6e
topology: v6e:2x2x1
jax: 0.10.0
libtpu: 0.0.40
codegen_flags: <defaults>
</compile_context>

<pallas_src>
import math
import numpy as np
import jax
import jax.numpy as jnp
from jax import lax
from jax.experimental import pallas as pl
from jax.experimental.pallas import tpu as pltpu

LOG2PI = math.log(2.0 * math.pi)
LANES = 128


# ----------------------------------------------------------------------------
# helpers
# ----------------------------------------------------------------------------
def _full_spec(shape):
    # whole-array block (grid has a single step)
    return pl.BlockSpec(shape, lambda i: (0,) * len(shape))


def _softplus(v):
    # numerically stable softplus (matches F.softplus)
    return jnp.maximum(v, 0.0) + jnp.log(1.0 + jnp.exp(-jnp.abs(v)))


# ----------------------------------------------------------------------------
# Parameter construction (deterministic, PyTorch-like uniform init).
# mu/var head weights are pre-concatenated: Wmv = [Wm | Wv], bmv = [bm | bv].
# ----------------------------------------------------------------------------
def _linear_params(key, in_dim, out_dim):
    k1, k2 = jax.random.split(key)
    bound = 1.0 / math.sqrt(in_dim)
    w = jax.random.uniform(k1, (in_dim, out_dim), jnp.float32, -bound, bound)
    b = jax.random.uniform(k2, (1, out_dim), jnp.float32, -bound, bound)
    return w, b


def _block_params(key, in_dim, out_dim, z_dim):
    k1, k2, k3 = jax.random.split(key, 3)
    w, b = _linear_params(k1, in_dim, out_dim)
    g = jnp.ones((1, out_dim), jnp.float32)    # BN gamma
    be = jnp.zeros((1, out_dim), jnp.float32)  # BN beta
    wm, bm = _linear_params(k2, out_dim, z_dim)
    wv, bv = _linear_params(k3, out_dim, z_dim)
    wmv = jnp.concatenate([wm, wv], axis=1)
    bmv = jnp.concatenate([bm, bv], axis=1)
    return (w, b, g, be, wmv, bmv)


def make_ladder_vae_params(key, input_dim, hidden_dims, latent_dims):
    neurons = [input_dim, *hidden_dims]
    n_keys = (len(neurons) - 1) + (len(hidden_dims) - 1) + 1
    keys = jax.random.split(key, n_keys)
    ki = iter(keys)
    encoders = [_block_params(next(ki), neurons[i - 1], neurons[i], latent_dims[i - 1])
                for i in range(1, len(neurons))]
    decoders = [_block_params(next(ki), latent_dims[i], hidden_dims[i], latent_dims[i - 1])
                for i in range(1, len(hidden_dims))][::-1]
    k1, k2 = jax.random.split(next(ki))
    recon = (*_linear_params(k1, latent_dims[0], hidden_dims[0]),
             *_linear_params(k2, hidden_dims[0], input_dim))
    # TODO(synk): BatchNorm1d running-mean/var buffers (eval mode) are not modeled;
    #             forward uses training-mode batch statistics like the PyTorch default.
    return {"encoders": encoders, "decoders": decoders, "recon": recon}


# ----------------------------------------------------------------------------
# Host-side parameter packing into ONE (rows, 128) f32 slab.
# Every entry starts at an 8-aligned row; encoder next-linear / mu-var head
# weights are column-concatenated so the kernel needs only one dot per layer.
# ----------------------------------------------------------------------------
def pack_params(params):
    enc = params["encoders"]
    dec = params["decoders"]
    rec = params["recon"]

    entries = {}
    rows = []
    off = 0

    def add(name, arr):
        nonlocal off
        a = np.asarray(arr, np.float32)
        if a.ndim == 1:
            a = a[None, :]
        r, c = a.shape
        assert c <= LANES
        rp = (-r) % 8
        blk = np.zeros((r + rp, LANES), np.float32)
        blk[:r, :c] = a
        entries[name] = (off, r, c)
        rows.append(blk)
        off += r + rp

    n_enc = len(enc)
    add("enc_w0", enc[0][0])
    add("enc_b0", enc[0][1])
    for k in range(n_enc):
        _, _, g, be, wmv, bmv = enc[k]
        add(f"enc_g{k}", g)
        add(f"enc_be{k}", be)
        if k < n_enc - 1:
            w_next, b_next = enc[k + 1][0], enc[k + 1][1]
            add(f"enc_wf{k}", np.concatenate([np.asarray(w_next), np.asarray(wmv)], axis=1))
            add(f"enc_bf{k}", np.concatenate([np.asarray(b_next), np.asarray(bmv)], axis=1))
        else:
            add(f"enc_wmv{k}", wmv)
            add(f"enc_bmv{k}", bmv)
    for k, blk in enumerate(dec):
        w, b, g, be, wmv, bmv = blk
        add(f"dec_w{k}", w)
        add(f"dec_b{k}", b)
        add(f"dec_g{k}", g)
        add(f"dec_be{k}", be)
        add(f"dec_wmv{k}", wmv)
        add(f"dec_bmv{k}", bmv)
    w1, b1, w2, b2 = rec
    add("rec_w1", w1)
    add("rec_b1", b1)
    add("rec_w2", w2)
    add("rec_b2", b2)

    slab = jnp.asarray(np.concatenate(rows, axis=0))
    plan = {
        "entries": entries,
        "enc_out": [b[0].shape[1] for b in enc],
        "enc_z": [b[4].shape[1] // 2 for b in enc],
        "dec_z": [b[4].shape[1] // 2 for b in dec],
        "input_dim": rec[2].shape[1],
    }
    return slab, plan


# ----------------------------------------------------------------------------
# Kernel factory: fused forward, fully unrolled at trace time.
# ----------------------------------------------------------------------------
def make_ladder_vae_forward(plan):
    ent = plan["entries"]
    enc_out = plan["enc_out"]
    enc_z = plan["enc_z"]
    dec_z = plan["dec_z"]
    input_dim = plan["input_dim"]
    n_enc = len(enc_out)
    n_dec = len(dec_z)
    nl = n_dec + 1
    z_dims = [enc_z[-1], *dec_z]
    payload = input_dim + sum(z_dims) + 1 + nl
    slab_w = ((payload + LANES - 1) // LANES) * LANES

    def kernel(x_ref, eps_ref, p_ref, out_ref):
        B = x_ref.shape[0]

        def ld(name):
            r0, r, c = ent[name]
            return p_ref[r0:r0 + r, 0:c]

        def dotf(a, w):
            return jnp.dot(a, w, preferred_element_type=jnp.float32)

        def bn_act(h, g, be):
            # BatchNorm1d training mode (biased var, eps=1e-5) + leaky_relu(0.1);
            # one-pass E[x^2]-E[x]^2 stats (fine for near-normalized activations).
            mean = jnp.mean(h, axis=0, keepdims=True)
            msq = jnp.mean(h * h, axis=0, keepdims=True)
            scale = g * lax.rsqrt(msq - mean * mean + 1e-5)
            hn = (h - mean) * scale + be
            return jnp.where(hn >= 0.0, hn, 0.1 * hn)

        # ---- encoder stack, fused [W_{k+1} | Wmv_k] heads ----
        h = dotf(x_ref[...], ld("enc_w0")) + ld("enc_b0")
        mu_var = []
        for k in range(n_enc):
            ha = bn_act(h, ld(f"enc_g{k}"), ld(f"enc_be{k}"))
            zk = enc_z[k]
            if k < n_enc - 1:
                nxt = enc_out[k + 1]
                f = dotf(ha, ld(f"enc_wf{k}")) + ld(f"enc_bf{k}")
                h = f[:, :nxt]
                mv = f[:, nxt:]
            else:
                mv = dotf(ha, ld(f"enc_wmv{k}")) + ld(f"enc_bmv{k}")
            mu_var.append((mv[:, :zk], _softplus(mv[:, zk:])))
        mu_var = mu_var[::-1]

        # ---- top layer: reparameterize + KL vs N(0, I) ----
        eps_off = 0
        mu, var = mu_var[0]
        d = z_dims[0]
        epsv = eps_ref[:, eps_off:eps_off + d]
        eps_off += d
        z = mu + epsv * jnp.sqrt(var)
        qz = jnp.sum(-0.5 * LOG2PI - 0.5 * jnp.log(var + 1e-8)
                     - (z - mu) ** 2 / (2.0 * var + 1e-8),
                     axis=-1, keepdims=True)
        pz = jnp.sum(-0.5 * LOG2PI - 0.5 * z * z, axis=-1, keepdims=True)
        latents, kls = [z], [qz - pz]

        # ---- ladder descent: decoder block + gaussian merge + reparam + KL ----
        for k in range(n_dec):
            mu_d, var_d = mu_var[k + 1]
            hd = dotf(z, ld(f"dec_w{k}")) + ld(f"dec_b{k}")
            had = bn_act(hd, ld(f"dec_g{k}"), ld(f"dec_be{k}"))
            zk = dec_z[k]
            mv = dotf(had, ld(f"dec_wmv{k}")) + ld(f"dec_bmv{k}")
            mu_t = mv[:, :zk]
            var_t = _softplus(mv[:, zk:])
            # precision merge with a SINGLE approx reciprocal:
            #   m_var = vd*vt/(vd+vt);  m_mu = (mu_d*vt + mu_t*vd)/(vd+vt)
            vd = var_d + 1e-8
            vt = var_t + 1e-8
            r = pl.reciprocal(vd + vt, approx=True)
            m_var = vd * vt * r
            m_mu = (mu_d * vt + mu_t * vd) * r
            d = z_dims[k + 1]
            epsv = eps_ref[:, eps_off:eps_off + d]
            eps_off += d
            z = m_mu + epsv * jnp.sqrt(m_var)
            qz = jnp.sum(-0.5 * LOG2PI - 0.5 * jnp.log(m_var + 1e-8)
                         - (z - m_mu) ** 2 / (2.0 * m_var + 1e-8),
                         axis=-1, keepdims=True)
            pz = jnp.sum(-0.5 * LOG2PI - 0.5 * jnp.log(var_t + 1e-8)
                         - (z - mu_t) ** 2 / (2.0 * var_t + 1e-8),
                         axis=-1, keepdims=True)
            latents.append(z)
            kls.append(qz - pz)

        # ---- final reconstruction decoder: sigmoid(relu(z@W1+b1)@W2+b2) ----
        hf = jnp.maximum(dotf(z, ld("rec_w1")) + ld("rec_b1"), 0.0)
        logits = dotf(hf, ld("rec_w2")) + ld("rec_b2")
        recon = 0.5 * (jnp.tanh(0.5 * logits) + 1.0)        # sigmoid via EUP tanh

        # ---- build the whole output row in registers; ONE dense store ----
        kl_total = kls[0]
        for klv in kls[1:]:
            kl_total = kl_total + klv
        ones_col = jnp.ones((B, 1), jnp.float32)
        kl_sums = [ones_col * jnp.sum(klv, axis=0, keepdims=True) for klv in kls]
        row = jnp.concatenate([recon, *latents, kl_total, *kl_sums], axis=-1)
        pad = slab_w - row.shape[-1]
        if pad:
            row = jnp.concatenate([row, jnp.zeros((B, pad), jnp.float32)], axis=-1)
        out_ref[...] = row

    def forward(x, eps, param_slab):
        """Returns (recon, latents, kl_divergence, kl_per_layer)."""
        B = x.shape[0]
        slab = pl.pallas_call(
            kernel,
            grid=(1,),
            in_specs=[_full_spec(x.shape), _full_spec(eps.shape),
                      _full_spec(param_slab.shape)],
            out_specs=_full_spec((B, slab_w)),
            out_shape=jax.ShapeDtypeStruct((B, slab_w), jnp.float32),
            compiler_params=pltpu.CompilerParams(
                dimension_semantics=("arbitrary",)),
        )(x, eps, param_slab)
        off = 0
        recon = slab[:, :input_dim]
        off = input_dim
        latents = []
        for d in z_dims:
            latents.append(slab[:, off:off + d])
            off += d
        kl_div = slab[:, off]
        off += 1
        kl_per_layer = [slab[0, off + i] for i in range(nl)]
        return recon, latents, kl_div, kl_per_layer

    return forward


# ----------------------------------------------------------------------------
# Pure-JAX reference (exact divides / sigmoid, two-pass BN) for sanity check
# ----------------------------------------------------------------------------
def _ref_block(x, p, zd):
    w, b, g, be, wmv, bmv = p
    h = x @ w + b
    mean = jnp.mean(h, axis=0, keepdims=True)
    bvar = jnp.mean((h - mean) ** 2, axis=0, keepdims=True)
    hn = (h - mean) / jnp.sqrt(bvar + 1e-5) * g + be
    ha = jnp.where(hn >= 0.0, hn, 0.1 * hn)
    mv = ha @ wmv + bmv
    return ha, mv[:, :zd], _softplus(mv[:, zd:])


def _ref_forward(x, params, eps_list):
    enc_zs = [blk[4].shape[1] // 2 for blk in params["encoders"]]
    dec_zs = [blk[4].shape[1] // 2 for blk in params["decoders"]]
    mvl = []
    h = x
    for blk, zd in zip(params["encoders"], enc_zs):
        h, mu, var = _ref_block(h, blk, zd)
        mvl.append((mu, var))
    mvl = mvl[::-1]
    mu, var = mvl[0]
    z = mu + eps_list[0] * jnp.sqrt(var)
    qz = jnp.sum(-0.5 * LOG2PI - 0.5 * jnp.log(var + 1e-8)
                 - (z - mu) ** 2 / (2.0 * var + 1e-8), axis=-1)
    pz = jnp.sum(-0.5 * LOG2PI - 0.5 * z * z, axis=-1)
    latents = [z]
    kls = [qz - pz]
    for k, (blk, zd) in enumerate(zip(params["decoders"], dec_zs)):
        mu_d, var_d = mvl[k + 1]
        _, mu_t, var_t = _ref_block(z, blk, zd)
        p1 = 1.0 / (var_d + 1e-8)
        p2 = 1.0 / (var_t + 1e-8)
        m_mu = (mu_d * p1 + mu_t * p2) / (p1 + p2)
        m_var = 1.0 / (p1 + p2)
        z = m_mu + eps_list[k + 1] * jnp.sqrt(m_var)
        qz = jnp.sum(-0.5 * LOG2PI - 0.5 * jnp.log(m_var + 1e-8)
                     - (z - m_mu) ** 2 / (2.0 * m_var + 1e-8), axis=-1)
        pz = jnp.sum(-0.5 * LOG2PI - 0.5 * jnp.log(var_t + 1e-8)
                     - (z - mu_t) ** 2 / (2.0 * var_t + 1e-8), axis=-1)
        latents.append(z)
        kls.append(qz - pz)
    w1, b1, w2, b2 = params["recon"]
    hh = jnp.maximum(z @ w1 + b1, 0.0)
    recon = jax.nn.sigmoid(hh @ w2 + b2)
    kl_total = kls[0]
    for klv in kls[1:]:
        kl_total = kl_total + klv
    return recon, latents, kl_total, kls


# ----------------------------------------------------------------------------
if __name__ == "__main__":
    B = 8
    input_dim = 32
    hidden_dims = [32, 24, 16]
    latent_dims = [16, 12, 8]

    key = jax.random.PRNGKey(0)
    k_x, k_p, k_e = jax.random.split(key, 3)

    x = jax.random.normal(k_x, (B, input_dim), jnp.float32)
    params = make_ladder_vae_params(k_p, input_dim, hidden_dims, latent_dims)
    param_slab, plan = pack_params(params)

    # deterministic "randn_like" noise packed into ONE (B, sum(z)) array.
    # TODO(synk): could be generated in-kernel via pltpu.prng_seed/stateful_normal;
    #             kept as a single external input so the pure-JAX reference can
    #             reproduce the exact samples.
    z_dims = [plan["enc_z"][-1], *plan["dec_z"]]          # [8, 12, 16]
    eps = jax.random.normal(k_e, (B, sum(z_dims)), jnp.float32)
    eps_list, o = [], 0
    for d in z_dims:
        eps_list.append(eps[:, o:o + d])
        o += d

    fwd = jax.jit(make_ladder_vae_forward(plan))
    recon, latents, kl_div, kl_per_layer = fwd(x, eps, param_slab)
    jax.block_until_ready((recon, latents, kl_div, kl_per_layer))

    # sanity check vs pure-JAX reference (tolerances cover the single approx-EUP
    # reciprocal per merge, tanh-sigmoid, and one-pass BN stats)
    recon_ref, latents_ref, kl_ref, kls_ref = _ref_forward(x, params, eps_list)
    np.testing.assert_allclose(np.asarray(recon), np.asarray(recon_ref),
                               rtol=5e-3, atol=5e-3)
    for a, b in zip(latents, latents_ref):
        np.testing.assert_allclose(np.asarray(a), np.asarray(b),
                                   rtol=5e-3, atol=5e-3)
    np.testing.assert_allclose(np.asarray(kl_div), np.asarray(kl_ref),
                               rtol=2e-2, atol=2e-2)
    for s, kref in zip(kl_per_layer, kls_ref):
        np.testing.assert_allclose(np.asarray(s), float(jnp.sum(kref)),
                                   rtol=2e-2, atol=2e-2)

    assert recon.shape == (B, input_dim)
    assert [tuple(z.shape) for z in latents] == [(B, d) for d in z_dims]
    assert kl_div.shape == (B,)
    assert len(kl_per_layer) == len(latent_dims)

    print("KERNEL_OK")
</pallas_src>

<mosaic_0001>
module attributes {stable_mosaic.version = 11 : i64} {
  func.func @kernel(%arg0: i32, %arg1: memref<8x32xf32, #tpu.memory_space<vmem>>, %arg2: memref<8x36xf32, #tpu.memory_space<vmem>>, %arg3: memref<376x128xf32, #tpu.memory_space<vmem>>, %arg4: memref<8x128xf32, #tpu.memory_space<vmem>>) attributes {dimension_semantics = [#tpu.dimension_semantics<arbitrary>], iteration_bounds = array<i64: 1>, scalar_prefetch = 0 : i64, scratch_operands = 0 : i64, tpu.core_type = #tpu.core_type<tc>, window_params = [{pipeline_mode = #tpu.pipeline_mode<synchronous>, transform_indices = @transform_0, window_bounds = array<i64: 8, 32>}, {pipeline_mode = #tpu.pipeline_mode<synchronous>, transform_indices = @transform_1, window_bounds = array<i64: 8, 36>}, {pipeline_mode = #tpu.pipeline_mode<synchronous>, transform_indices = @transform_2, window_bounds = array<i64: 376, 128>}, {pipeline_mode = #tpu.pipeline_mode<synchronous>, transform_indices = @transform_3, window_bounds = array<i64: 8, 128>}]} {
    %c0 = arith.constant 0 : index
    %c0_0 = arith.constant 0 : index
    %0 = vector.load %arg1[%c0, %c0_0] : memref<8x32xf32, #tpu.memory_space<vmem>>, vector<8x32xf32>
    %c0_1 = arith.constant 0 : index
    %c0_2 = arith.constant 0 : index
    %1 = vector.load %arg3[%c0_1, %c0_2] : memref<376x128xf32, #tpu.memory_space<vmem>>, vector<32x32xf32>
    %cst = arith.constant dense<0.000000e+00> : vector<8x32xf32>
    %2 = tpu.matmul %0, %1, %cst {dimension_numbers = #tpu.dot_dimension_numbers<[1], [0], [0], [1], [0, 0, 1, 1], [], []>} : vector<8x32xf32>, vector<32x32xf32>, vector<8x32xf32> -> vector<8x32xf32>
    %c32 = arith.constant 32 : index
    %c0_3 = arith.constant 0 : index
    %3 = vector.load %arg3[%c32, %c0_3] : memref<376x128xf32, #tpu.memory_space<vmem>>, vector<1x32xf32>
    %4 = vector.broadcast %3 : vector<1x32xf32> to vector<8x32xf32>
    %5 = arith.addf %2, %4 : vector<8x32xf32>
    %c40 = arith.constant 40 : index
    %c0_4 = arith.constant 0 : index
    %6 = vector.load %arg3[%c40, %c0_4] : memref<376x128xf32, #tpu.memory_space<vmem>>, vector<1x32xf32>
    %c48 = arith.constant 48 : index
    %c0_5 = arith.constant 0 : index
    %7 = vector.load %arg3[%c48, %c0_5] : memref<376x128xf32, #tpu.memory_space<vmem>>, vector<1x32xf32>
    %cst_6 = arith.constant dense<0.000000e+00> : vector<32xf32>
    %8 = vector.multi_reduction <add>, %5, %cst_6 [0] : vector<8x32xf32> to vector<32xf32>
    %9 = vector.shape_cast %8 : vector<32xf32> to vector<1x32xf32>
    %cst_7 = arith.constant 8.000000e+00 : f32
    %10 = vector.broadcast %cst_7 : f32 to vector<1x32xf32>
    %11 = arith.divf %9, %10 : vector<1x32xf32>
    %12 = arith.mulf %5, %5 : vector<8x32xf32>
    %cst_8 = arith.constant dense<0.000000e+00> : vector<32xf32>
    %13 = vector.multi_reduction <add>, %12, %cst_8 [0] : vector<8x32xf32> to vector<32xf32>
    %14 = vector.shape_cast %13 : vector<32xf32> to vector<1x32xf32>
    %cst_9 = arith.constant 8.000000e+00 : f32
    %15 = vector.broadcast %cst_9 : f32 to vector<1x32xf32>
    %16 = arith.divf %14, %15 : vector<1x32xf32>
    %17 = arith.mulf %11, %11 : vector<1x32xf32>
    %18 = arith.subf %16, %17 : vector<1x32xf32>
    %cst_10 = arith.constant 9.99999974E-6 : f32
    %19 = vector.broadcast %cst_10 : f32 to vector<1x32xf32>
    %20 = arith.addf %18, %19 : vector<1x32xf32>
    %21 = math.rsqrt %20 : vector<1x32xf32>
    %22 = arith.mulf %6, %21 : vector<1x32xf32>
    %23 = vector.broadcast %11 : vector<1x32xf32> to vector<8x32xf32>
    %24 = arith.subf %5, %23 : vector<8x32xf32>
    %25 = vector.broadcast %22 : vector<1x32xf32> to vector<8x32xf32>
    %26 = arith.mulf %24, %25 : vector<8x32xf32>
    %27 = vector.broadcast %7 : vector<1x32xf32> to vector<8x32xf32>
    %28 = arith.addf %26, %27 : vector<8x32xf32>
    %cst_11 = arith.constant 0.000000e+00 : f32
    %29 = vector.broadcast %cst_11 : f32 to vector<8x32xf32>
    %30 = arith.cmpf oge, %28, %29 : vector<8x32xf32>
    %cst_12 = arith.constant 1.000000e-01 : f32
    %31 = vector.broadcast %cst_12 : f32 to vector<8x32xf32>
    %32 = arith.mulf %31, %28 : vector<8x32xf32>
    %33 = arith.select %30, %28, %32 : vector<8x32xi1>, vector<8x32xf32>
    %c56 = arith.constant 56 : index
    %c0_13 = arith.constant 0 : index
    %34 = vector.load %arg3[%c56, %c0_13] : memref<376x128xf32, #tpu.memory_space<vmem>>, vector<32x56xf32>
    %cst_14 = arith.constant dense<0.000000e+00> : vector<8x56xf32>
    %35 = tpu.matmul %33, %34, %cst_14 {dimension_numbers = #tpu.dot_dimension_numbers<[1], [0], [0], [1], [0, 0, 1, 1], [], []>} : vector<8x32xf32>, vector<32x56xf32>, vector<8x56xf32> -> vector<8x56xf32>
    %c88 = arith.constant 88 : index
    %c0_15 = arith.constant 0 : index
    %36 = vector.load %arg3[%c88, %c0_15] : memref<376x128xf32, #tpu.memory_space<vmem>>, vector<1x56xf32>
    %37 = vector.broadcast %36 : vector<1x56xf32> to vector<8x56xf32>
    %38 = arith.addf %35, %37 : vector<8x56xf32>
    %39 = vector.extract_strided_slice %38 {offsets = [0, 0], sizes = [8, 24], strides = [1, 1]} : vector<8x56xf32> to vector<8x24xf32>
    %40 = vector.extract_strided_slice %38 {offsets = [0, 24], sizes = [8, 32], strides = [1, 1]} : vector<8x56xf32> to vector<8x32xf32>
    %41 = vector.extract_strided_slice %40 {offsets = [0, 0], sizes = [8, 16], strides = [1, 1]} : vector<8x32xf32> to vector<8x16xf32>
    %42 = vector.extract_strided_slice %40 {offsets = [0, 16], sizes = [8, 16], strides = [1, 1]} : vector<8x32xf32> to vector<8x16xf32>
    %cst_16 = arith.constant 0.000000e+00 : f32
    %43 = vector.broadcast %cst_16 : f32 to vector<8x16xf32>
    %44 = arith.maximumf %42, %43 : vector<8x16xf32>
    %45 = math.absf %42 : vector<8x16xf32>
    %cst_17 = arith.constant 0.000000e+00 : f32
    %46 = vector.broadcast %cst_17 : f32 to vector<8x16xf32>
    %47 = arith.subf %46, %45 : vector<8x16xf32>
    %48 = math.exp %47 : vector<8x16xf32>
    %cst_18 = arith.constant 1.000000e+00 : f32
    %49 = vector.broadcast %cst_18 : f32 to vector<8x16xf32>
    %50 = arith.addf %49, %48 : vector<8x16xf32>
    %51 = math.log %50 : vector<8x16xf32>
    %52 = arith.addf %44, %51 : vector<8x16xf32>
    %c96 = arith.constant 96 : index
    %c0_19 = arith.constant 0 : index
    %53 = vector.load %arg3[%c96, %c0_19] : memref<376x128xf32, #tpu.memory_space<vmem>>, vector<1x24xf32>
    %c104 = arith.constant 104 : index
    %c0_20 = arith.constant 0 : index
    %54 = vector.load %arg3[%c104, %c0_20] : memref<376x128xf32, #tpu.memory_space<vmem>>, vector<1x24xf32>
    %cst_21 = arith.constant dense<0.000000e+00> : vector<24xf32>
    %55 = vector.multi_reduction <add>, %39, %cst_21 [0] : vector<8x24xf32> to vector<24xf32>
    %56 = vector.shape_cast %55 : vector<24xf32> to vector<1x24xf32>
    %cst_22 = arith.constant 8.000000e+00 : f32
    %57 = vector.broadcast %cst_22 : f32 to vector<1x24xf32>
    %58 = arith.divf %56, %57 : vector<1x24xf32>
    %59 = arith.mulf %39, %39 : vector<8x24xf32>
    %cst_23 = arith.constant dense<0.000000e+00> : vector<24xf32>
    %60 = vector.multi_reduction <add>, %59, %cst_23 [0] : vector<8x24xf32> to vector<24xf32>
    %61 = vector.shape_cast %60 : vector<24xf32> to vector<1x24xf32>
    %cst_24 = arith.constant 8.000000e+00 : f32
    %62 = vector.broadcast %cst_24 : f32 to vector<1x24xf32>
    %63 = arith.divf %61, %62 : vector<1x24xf32>
    %64 = arith.mulf %58, %58 : vector<1x24xf32>
    %65 = arith.subf %63, %64 : vector<1x24xf32>
    %cst_25 = arith.constant 9.99999974E-6 : f32
    %66 = vector.broadcast %cst_25 : f32 to vector<1x24xf32>
    %67 = arith.addf %65, %66 : vector<1x24xf32>
    %68 = math.rsqrt %67 : vector<1x24xf32>
    %69 = arith.mulf %53, %68 : vector<1x24xf32>
    %70 = vector.broadcast %58 : vector<1x24xf32> to vector<8x24xf32>
    %71 = arith.subf %39, %70 : vector<8x24xf32>
    %72 = vector.broadcast %69 : vector<1x24xf32> to vector<8x24xf32>
    %73 = arith.mulf %71, %72 : vector<8x24xf32>
    %74 = vector.broadcast %54 : vector<1x24xf32> to vector<8x24xf32>
    %75 = arith.addf %73, %74 : vector<8x24xf32>
    %cst_26 = arith.constant 0.000000e+00 : f32
    %76 = vector.broadcast %cst_26 : f32 to vector<8x24xf32>
    %77 = arith.cmpf oge, %75, %76 : vector<8x24xf32>
    %cst_27 = arith.constant 1.000000e-01 : f32
    %78 = vector.broadcast %cst_27 : f32 to vector<8x24xf32>
    %79 = arith.mulf %78, %75 : vector<8x24xf32>
    %80 = arith.select %77, %75, %79 : vector<8x24xi1>, vector<8x24xf32>
    %c112 = arith.constant 112 : index
    %c0_28 = arith.constant 0 : index
    %81 = vector.load %arg3[%c112, %c0_28] : memref<376x128xf32, #tpu.memory_space<vmem>>, vector<24x40xf32>
    %cst_29 = arith.constant dense<0.000000e+00> : vector<8x40xf32>
    %82 = tpu.matmul %80, %81, %cst_29 {dimension_numbers = #tpu.dot_dimension_numbers<[1], [0], [0], [1], [0, 0, 1, 1], [], []>} : vector<8x24xf32>, vector<24x40xf32>, vector<8x40xf32> -> vector<8x40xf32>
    %c136 = arith.constant 136 : index
    %c0_30 = arith.constant 0 : index
    %83 = vector.load %arg3[%c136, %c0_30] : memref<376x128xf32, #tpu.memory_space<vmem>>, vector<1x40xf32>
    %84 = vector.broadcast %83 : vector<1x40xf32> to vector<8x40xf32>
    %85 = arith.addf %82, %84 : vector<8x40xf32>
    %86 = vector.extract_strided_slice %85 {offsets = [0, 0], sizes = [8, 16], strides = [1, 1]} : vector<8x40xf32> to vector<8x16xf32>
    %87 = vector.extract_strided_slice %85 {offsets = [0, 16], sizes = [8, 24], strides = [1, 1]} : vector<8x40xf32> to vector<8x24xf32>
    %88 = vector.extract_strided_slice %87 {offsets = [0, 0], sizes = [8, 12], strides = [1, 1]} : vector<8x24xf32> to vector<8x12xf32>
    %89 = vector.extract_strided_slice %87 {offsets = [0, 12], sizes = [8, 12], strides = [1, 1]} : vector<8x24xf32> to vector<8x12xf32>
    %cst_31 = arith.constant 0.000000e+00 : f32
    %90 = vector.broadcast %cst_31 : f32 to vector<8x12xf32>
    %91 = arith.maximumf %89, %90 : vector<8x12xf32>
    %92 = math.absf %89 : vector<8x12xf32>
    %cst_32 = arith.constant 0.000000e+00 : f32
    %93 = vector.broadcast %cst_32 : f32 to vector<8x12xf32>
    %94 = arith.subf %93, %92 : vector<8x12xf32>
    %95 = math.exp %94 : vector<8x12xf32>
    %cst_33 = arith.constant 1.000000e+00 : f32
    %96 = vector.broadcast %cst_33 : f32 to vector<8x12xf32>
    %97 = arith.addf %96, %95 : vector<8x12xf32>
    %98 = math.log %97 : vector<8x12xf32>
    %99 = arith.addf %91, %98 : vector<8x12xf32>
    %c144 = arith.constant 144 : index
    %c0_34 = arith.constant 0 : index
    %100 = vector.load %arg3[%c144, %c0_34] : memref<376x128xf32, #tpu.memory_space<vmem>>, vector<1x16xf32>
    %c152 = arith.constant 152 : index
    %c0_35 = arith.constant 0 : index
    %101 = vector.load %arg3[%c152, %c0_35] : memref<376x128xf32, #tpu.memory_space<vmem>>, vector<1x16xf32>
    %cst_36 = arith.constant dense<0.000000e+00> : vector<16xf32>
    %102 = vector.multi_reduction <add>, %86, %cst_36 [0] : vector<8x16xf32> to vector<16xf32>
    %103 = vector.shape_cast %102 : vector<16xf32> to vector<1x16xf32>
    %cst_37 = arith.constant 8.000000e+00 : f32
    %104 = vector.broadcast %cst_37 : f32 to vector<1x16xf32>
    %105 = arith.divf %103, %104 : vector<1x16xf32>
    %106 = arith.mulf %86, %86 : vector<8x16xf32>
    %cst_38 = arith.constant dense<0.000000e+00> : vector<16xf32>
    %107 = vector.multi_reduction <add>, %106, %cst_38 [0] : vector<8x16xf32> to vector<16xf32>
    %108 = vector.shape_cast %107 : vector<16xf32> to vector<1x16xf32>
    %cst_39 = arith.constant 8.000000e+00 : f32
    %109 = vector.broadcast %cst_39 : f32 to vector<1x16xf32>
    %110 = arith.divf %108, %109 : vector<1x16xf32>
    %111 = arith.mulf %105, %105 : vector<1x16xf32>
    %112 = arith.subf %110, %111 : vector<1x16xf32>
    %cst_40 = arith.constant 9.99999974E-6 : f32
    %113 = vector.broadcast %cst_40 : f32 to vector<1x16xf32>
    %114 = arith.addf %112, %113 : vector<1x16xf32>
    %115 = math.rsqrt %114 : vector<1x16xf32>
    %116 = arith.mulf %100, %115 : vector<1x16xf32>
    %117 = vector.broadcast %105 : vector<1x16xf32> to vector<8x16xf32>
    %118 = arith.subf %86, %117 : vector<8x16xf32>
    %119 = vector.broadcast %116 : vector<1x16xf32> to vector<8x16xf32>
    %120 = arith.mulf %118, %119 : vector<8x16xf32>
    %121 = vector.broadcast %101 : vector<1x16xf32> to vector<8x16xf32>
    %122 = arith.addf %120, %121 : vector<8x16xf32>
    %cst_41 = arith.constant 0.000000e+00 : f32
    %123 = vector.broadcast %cst_41 : f32 to vector<8x16xf32>
    %124 = arith.cmpf oge, %122, %123 : vector<8x16xf32>
    %cst_42 = arith.constant 1.000000e-01 : f32
    %125 = vector.broadcast %cst_42 : f32 to vector<8x16xf32>
    %126 = arith.mulf %125, %122 : vector<8x16xf32>
    %127 = arith.select %124, %122, %126 : vector<8x16xi1>, vector<8x16xf32>
    %c160 = arith.constant 160 : index
    %c0_43 = arith.constant 0 : index
    %128 = vector.load %arg3[%c160, %c0_43] : memref<376x128xf32, #tpu.memory_space<vmem>>, vector<16x16xf32>
    %cst_44 = arith.constant dense<0.000000e+00> : vector<8x16xf32>
    %129 = tpu.matmul %127, %128, %cst_44 {dimension_numbers = #tpu.dot_dimension_numbers<[1], [0], [0], [1], [0, 0, 1, 1], [], []>} : vector<8x16xf32>, vector<16x16xf32>, vector<8x16xf32> -> vector<8x16xf32>
    %c176 = arith.constant 176 : index
    %c0_45 = arith.constant 0 : index
    %130 = vector.load %arg3[%c176, %c0_45] : memref<376x128xf32, #tpu.memory_space<vmem>>, vector<1x16xf32>
    %131 = vector.broadcast %130 : vector<1x16xf32> to vector<8x16xf32>
    %132 = arith.addf %129, %131 : vector<8x16xf32>
    %133 = vector.extract_strided_slice %132 {offsets = [0, 0], sizes = [8, 8], strides = [1, 1]} : vector<8x16xf32> to vector<8x8xf32>
    %134 = vector.extract_strided_slice %132 {offsets = [0, 8], sizes = [8, 8], strides = [1, 1]} : vector<8x16xf32> to vector<8x8xf32>
    %cst_46 = arith.constant 0.000000e+00 : f32
    %135 = vector.broadcast %cst_46 : f32 to vector<8x8xf32>
    %136 = arith.maximumf %134, %135 : vector<8x8xf32>
    %137 = math.absf %134 : vector<8x8xf32>
    %cst_47 = arith.constant 0.000000e+00 : f32
    %138 = vector.broadcast %cst_47 : f32 to vector<8x8xf32>
    %139 = arith.subf %138, %137 : vector<8x8xf32>
    %140 = math.exp %139 : vector<8x8xf32>
    %cst_48 = arith.constant 1.000000e+00 : f32
    %141 = vector.broadcast %cst_48 : f32 to vector<8x8xf32>
    %142 = arith.addf %141, %140 : vector<8x8xf32>
    %143 = math.log %142 : vector<8x8xf32>
    %144 = arith.addf %136, %143 : vector<8x8xf32>
    %c0_49 = arith.constant 0 : index
    %c0_50 = arith.constant 0 : index
    %145 = vector.load %arg2[%c0_49, %c0_50] : memref<8x36xf32, #tpu.memory_space<vmem>>, vector<8x8xf32>
    %146 = math.sqrt %144 : vector<8x8xf32>
    %147 = arith.mulf %145, %146 : vector<8x8xf32>
    %148 = arith.addf %133, %147 : vector<8x8xf32>
    %cst_51 = arith.constant 9.99999993E-9 : f32
    %149 = vector.broadcast %cst_51 : f32 to vector<8x8xf32>
    %150 = arith.addf %144, %149 : vector<8x8xf32>
    %151 = math.log %150 : vector<8x8xf32>
    %cst_52 = arith.constant 5.000000e-01 : f32
    %152 = vector.broadcast %cst_52 : f32 to vector<8x8xf32>
    %153 = arith.mulf %152, %151 : vector<8x8xf32>
    %cst_53 = arith.constant -0.918938517 : f32
    %154 = vector.broadcast %cst_53 : f32 to vector<8x8xf32>
    %155 = arith.subf %154, %153 : vector<8x8xf32>
    %156 = arith.subf %148, %133 : vector<8x8xf32>
    %157 = arith.mulf %156, %156 : vector<8x8xf32>
    %cst_54 = arith.constant 2.000000e+00 : f32
    %158 = vector.broadcast %cst_54 : f32 to vector<8x8xf32>
    %159 = arith.mulf %158, %144 : vector<8x8xf32>
    %cst_55 = arith.constant 9.99999993E-9 : f32
    %160 = vector.broadcast %cst_55 : f32 to vector<8x8xf32>
    %161 = arith.addf %159, %160 : vector<8x8xf32>
    %162 = arith.divf %157, %161 : vector<8x8xf32>
    %163 = arith.subf %155, %162 : vector<8x8xf32>
    %cst_56 = arith.constant dense<0.000000e+00> : vector<8xf32>
    %164 = vector.multi_reduction <add>, %163, %cst_56 [1] : vector<8x8xf32> to vector<8xf32>
    %165 = vector.shape_cast %164 : vector<8xf32> to vector<8x1xf32>
    %cst_57 = arith.constant 5.000000e-01 : f32
    %166 = vector.broadcast %cst_57 : f32 to vector<8x8xf32>
    %167 = arith.mulf %166, %148 : vector<8x8xf32>
    %168 = arith.mulf %167, %148 : vector<8x8xf32>
    %cst_58 = arith.constant -0.918938517 : f32
    %169 = vector.broadcast %cst_58 : f32 to vector<8x8xf32>
    %170 = arith.subf %169, %168 : vector<8x8xf32>
    %cst_59 = arith.constant dense<0.000000e+00> : vector<8xf32>
    %171 = vector.multi_reduction <add>, %170, %cst_59 [1] : vector<8x8xf32> to vector<8xf32>
    %172 = vector.shape_cast %171 : vector<8xf32> to vector<8x1xf32>
    %173 = arith.subf %165, %172 : vector<8x1xf32>
    %c184 = arith.constant 184 : index
    %c0_60 = arith.constant 0 : index
    %174 = vector.load %arg3[%c184, %c0_60] : memref<376x128xf32, #tpu.memory_space<vmem>>, vector<8x16xf32>
    %cst_61 = arith.constant dense<0.000000e+00> : vector<8x16xf32>
    %175 = tpu.matmul %148, %174, %cst_61 {dimension_numbers = #tpu.dot_dimension_numbers<[1], [0], [0], [1], [0, 0, 1, 1], [], []>} : vector<8x8xf32>, vector<8x16xf32>, vector<8x16xf32> -> vector<8x16xf32>
    %c192 = arith.constant 192 : index
    %c0_62 = arith.constant 0 : index
    %176 = vector.load %arg3[%c192, %c0_62] : memref<376x128xf32, #tpu.memory_space<vmem>>, vector<1x16xf32>
    %177 = vector.broadcast %176 : vector<1x16xf32> to vector<8x16xf32>
    %178 = arith.addf %175, %177 : vector<8x16xf32>
    %c200 = arith.constant 200 : index
    %c0_63 = arith.constant 0 : index
    %179 = vector.load %arg3[%c200, %c0_63] : memref<376x128xf32, #tpu.memory_space<vmem>>, vector<1x16xf32>
    %c208 = arith.constant 208 : index
    %c0_64 = arith.constant 0 : index
    %180 = vector.load %arg3[%c208, %c0_64] : memref<376x128xf32, #tpu.memory_space<vmem>>, vector<1x16xf32>
    %cst_65 = arith.constant dense<0.000000e+00> : vector<16xf32>
    %181 = vector.multi_reduction <add>, %178, %cst_65 [0] : vector<8x16xf32> to vector<16xf32>
    %182 = vector.shape_cast %181 : vector<16xf32> to vector<1x16xf32>
    %cst_66 = arith.constant 8.000000e+00 : f32
    %183 = vector.broadcast %cst_66 : f32 to vector<1x16xf32>
    %184 = arith.divf %182, %183 : vector<1x16xf32>
    %185 = arith.mulf %178, %178 : vector<8x16xf32>
    %cst_67 = arith.constant dense<0.000000e+00> : vector<16xf32>
    %186 = vector.multi_reduction <add>, %185, %cst_67 [0] : vector<8x16xf32> to vector<16xf32>
    %187 = vector.shape_cast %186 : vector<16xf32> to vector<1x16xf32>
    %cst_68 = arith.constant 8.000000e+00 : f32
    %188 = vector.broadcast %cst_68 : f32 to vector<1x16xf32>
    %189 = arith.divf %187, %188 : vector<1x16xf32>
    %190 = arith.mulf %184, %184 : vector<1x16xf32>
    %191 = arith.subf %189, %190 : vector<1x16xf32>
    %cst_69 = arith.constant 9.99999974E-6 : f32
    %192 = vector.broadcast %cst_69 : f32 to vector<1x16xf32>
    %193 = arith.addf %191, %192 : vector<1x16xf32>
    %194 = math.rsqrt %193 : vector<1x16xf32>
    %195 = arith.mulf %179, %194 : vector<1x16xf32>
    %196 = vector.broadcast %184 : vector<1x16xf32> to vector<8x16xf32>
    %197 = arith.subf %178, %196 : vector<8x16xf32>
    %198 = vector.broadcast %195 : vector<1x16xf32> to vector<8x16xf32>
    %199 = arith.mulf %197, %198 : vector<8x16xf32>
    %200 = vector.broadcast %180 : vector<1x16xf32> to vector<8x16xf32>
    %201 = arith.addf %199, %200 : vector<8x16xf32>
    %cst_70 = arith.constant 0.000000e+00 : f32
    %202 = vector.broadcast %cst_70 : f32 to vector<8x16xf32>
    %203 = arith.cmpf oge, %201, %202 : vector<8x16xf32>
    %cst_71 = arith.constant 1.000000e-01 : f32
    %204 = vector.broadcast %cst_71 : f32 to vector<8x16xf32>
    %205 = arith.mulf %204, %201 : vector<8x16xf32>
    %206 = arith.select %203, %201, %205 : vector<8x16xi1>, vector<8x16xf32>
    %c216 = arith.constant 216 : index
    %c0_72 = arith.constant 0 : index
    %207 = vector.load %arg3[%c216, %c0_72] : memref<376x128xf32, #tpu.memory_space<vmem>>, vector<16x24xf32>
    %cst_73 = arith.constant dense<0.000000e+00> : vector<8x24xf32>
    %208 = tpu.matmul %206, %207, %cst_73 {dimension_numbers = #tpu.dot_dimension_numbers<[1], [0], [0], [1], [0, 0, 1, 1], [], []>} : vector<8x16xf32>, vector<16x24xf32>, vector<8x24xf32> -> vector<8x24xf32>
    %c232 = arith.constant 232 : index
    %c0_74 = arith.constant 0 : index
    %209 = vector.load %arg3[%c232, %c0_74] : memref<376x128xf32, #tpu.memory_space<vmem>>, vector<1x24xf32>
    %210 = vector.broadcast %209 : vector<1x24xf32> to vector<8x24xf32>
    %211 = arith.addf %208, %210 : vector<8x24xf32>
    %212 = vector.extract_strided_slice %211 {offsets = [0, 0], sizes = [8, 12], strides = [1, 1]} : vector<8x24xf32> to vector<8x12xf32>
    %213 = vector.extract_strided_slice %211 {offsets = [0, 12], sizes = [8, 12], strides = [1, 1]} : vector<8x24xf32> to vector<8x12xf32>
    %cst_75 = arith.constant 0.000000e+00 : f32
    %214 = vector.broadcast %cst_75 : f32 to vector<8x12xf32>
    %215 = arith.maximumf %213, %214 : vector<8x12xf32>
    %216 = math.absf %213 : vector<8x12xf32>
    %cst_76 = arith.constant 0.000000e+00 : f32
    %217 = vector.broadcast %cst_76 : f32 to vector<8x12xf32>
    %218 = arith.subf %217, %216 : vector<8x12xf32>
    %219 = math.exp %218 : vector<8x12xf32>
    %cst_77 = arith.constant 1.000000e+00 : f32
    %220 = vector.broadcast %cst_77 : f32 to vector<8x12xf32>
    %221 = arith.addf %220, %219 : vector<8x12xf32>
    %222 = math.log %221 : vector<8x12xf32>
    %223 = arith.addf %215, %222 : vector<8x12xf32>
    %cst_78 = arith.constant 9.99999993E-9 : f32
    %224 = vector.broadcast %cst_78 : f32 to vector<8x12xf32>
    %225 = arith.addf %99, %224 : vector<8x12xf32>
    %cst_79 = arith.constant 9.99999993E-9 : f32
    %226 = vector.broadcast %cst_79 : f32 to vector<8x12xf32>
    %227 = arith.addf %223, %226 : vector<8x12xf32>
    %228 = arith.addf %225, %227 : vector<8x12xf32>
    %229 = tpu.reciprocal %228 {approx = true} : vector<8x12xf32> -> vector<8x12xf32>
    %230 = arith.mulf %225, %227 : vector<8x12xf32>
    %231 = arith.mulf %230, %229 : vector<8x12xf32>
    %232 = arith.mulf %88, %227 : vector<8x12xf32>
    %233 = arith.mulf %212, %225 : vector<8x12xf32>
    %234 = arith.addf %232, %233 : vector<8x12xf32>
    %235 = arith.mulf %234, %229 : vector<8x12xf32>
    %c0_80 = arith.constant 0 : index
    %c8 = arith.constant 8 : index
    %236 = vector.load %arg2[%c0_80, %c8] : memref<8x36xf32, #tpu.memory_space<vmem>>, vector<8x12xf32>
    %237 = math.sqrt %231 : vector<8x12xf32>
    %238 = arith.mulf %236, %237 : vector<8x12xf32>
    %239 = arith.addf %235, %238 : vector<8x12xf32>
    %cst_81 = arith.constant 9.99999993E-9 : f32
    %240 = vector.broadcast %cst_81 : f32 to vector<8x12xf32>
    %241 = arith.addf %231, %240 : vector<8x12xf32>
    %242 = math.log %241 : vector<8x12xf32>
    %cst_82 = arith.constant 5.000000e-01 : f32
    %243 = vector.broadcast %cst_82 : f32 to vector<8x12xf32>
    %244 = arith.mulf %243, %242 : vector<8x12xf32>
    %cst_83 = arith.constant -0.918938517 : f32
    %245 = vector.broadcast %cst_83 : f32 to vector<8x12xf32>
    %246 = arith.subf %245, %244 : vector<8x12xf32>
    %247 = arith.subf %239, %235 : vector<8x12xf32>
    %248 = arith.mulf %247, %247 : vector<8x12xf32>
    %cst_84 = arith.constant 2.000000e+00 : f32
    %249 = vector.broadcast %cst_84 : f32 to vector<8x12xf32>
    %250 = arith.mulf %249, %231 : vector<8x12xf32>
    %cst_85 = arith.constant 9.99999993E-9 : f32
    %251 = vector.broadcast %cst_85 : f32 to vector<8x12xf32>
    %252 = arith.addf %250, %251 : vector<8x12xf32>
    %253 = arith.divf %248, %252 : vector<8x12xf32>
    %254 = arith.subf %246, %253 : vector<8x12xf32>
    %cst_86 = arith.constant dense<0.000000e+00> : vector<8xf32>
    %255 = vector.multi_reduction <add>, %254, %cst_86 [1] : vector<8x12xf32> to vector<8xf32>
    %256 = vector.shape_cast %255 : vector<8xf32> to vector<8x1xf32>
    %cst_87 = arith.constant 9.99999993E-9 : f32
    %257 = vector.broadcast %cst_87 : f32 to vector<8x12xf32>
    %258 = arith.addf %223, %257 : vector<8x12xf32>
    %259 = math.log %258 : vector<8x12xf32>
    %cst_88 = arith.constant 5.000000e-01 : f32
    %260 = vector.broadcast %cst_88 : f32 to vector<8x12xf32>
    %261 = arith.mulf %260, %259 : vector<8x12xf32>
    %cst_89 = arith.constant -0.918938517 : f32
    %262 = vector.broadcast %cst_89 : f32 to vector<8x12xf32>
    %263 = arith.subf %262, %261 : vector<8x12xf32>
    %264 = arith.subf %239, %212 : vector<8x12xf32>
    %265 = arith.mulf %264, %264 : vector<8x12xf32>
    %cst_90 = arith.constant 2.000000e+00 : f32
    %266 = vector.broadcast %cst_90 : f32 to vector<8x12xf32>
    %267 = arith.mulf %266, %223 : vector<8x12xf32>
    %cst_91 = arith.constant 9.99999993E-9 : f32
    %268 = vector.broadcast %cst_91 : f32 to vector<8x12xf32>
    %269 = arith.addf %267, %268 : vector<8x12xf32>
    %270 = arith.divf %265, %269 : vector<8x12xf32>
    %271 = arith.subf %263, %270 : vector<8x12xf32>
    %cst_92 = arith.constant dense<0.000000e+00> : vector<8xf32>
    %272 = vector.multi_reduction <add>, %271, %cst_92 [1] : vector<8x12xf32> to vector<8xf32>
    %273 = vector.shape_cast %272 : vector<8xf32> to vector<8x1xf32>
    %274 = arith.subf %256, %273 : vector<8x1xf32>
    %c240 = arith.constant 240 : index
    %c0_93 = arith.constant 0 : index
    %275 = vector.load %arg3[%c240, %c0_93] : memref<376x128xf32, #tpu.memory_space<vmem>>, vector<12x24xf32>
    %cst_94 = arith.constant dense<0.000000e+00> : vector<8x24xf32>
    %276 = tpu.matmul %239, %275, %cst_94 {dimension_numbers = #tpu.dot_dimension_numbers<[1], [0], [0], [1], [0, 0, 1, 1], [], []>} : vector<8x12xf32>, vector<12x24xf32>, vector<8x24xf32> -> vector<8x24xf32>
    %c256 = arith.constant 256 : index
    %c0_95 = arith.constant 0 : index
    %277 = vector.load %arg3[%c256, %c0_95] : memref<376x128xf32, #tpu.memory_space<vmem>>, vector<1x24xf32>
    %278 = vector.broadcast %277 : vector<1x24xf32> to vector<8x24xf32>
    %279 = arith.addf %276, %278 : vector<8x24xf32>
    %c264 = arith.constant 264 : index
    %c0_96 = arith.constant 0 : index
    %280 = vector.load %arg3[%c264, %c0_96] : memref<376x128xf32, #tpu.memory_space<vmem>>, vector<1x24xf32>
    %c272 = arith.constant 272 : index
    %c0_97 = arith.constant 0 : index
    %281 = vector.load %arg3[%c272, %c0_97] : memref<376x128xf32, #tpu.memory_space<vmem>>, vector<1x24xf32>
    %cst_98 = arith.constant dense<0.000000e+00> : vector<24xf32>
    %282 = vector.multi_reduction <add>, %279, %cst_98 [0] : vector<8x24xf32> to vector<24xf32>
    %283 = vector.shape_cast %282 : vector<24xf32> to vector<1x24xf32>
    %cst_99 = arith.constant 8.000000e+00 : f32
    %284 = vector.broadcast %cst_99 : f32 to vector<1x24xf32>
    %285 = arith.divf %283, %284 : vector<1x24xf32>
    %286 = arith.mulf %279, %279 : vector<8x24xf32>
    %cst_100 = arith.constant dense<0.000000e+00> : vector<24xf32>
    %287 = vector.multi_reduction <add>, %286, %cst_100 [0] : vector<8x24xf32> to vector<24xf32>
    %288 = vector.shape_cast %287 : vector<24xf32> to vector<1x24xf32>
    %cst_101 = arith.constant 8.000000e+00 : f32
    %289 = vector.broadcast %cst_101 : f32 to vector<1x24xf32>
    %290 = arith.divf %288, %289 : vector<1x24xf32>
    %291 = arith.mulf %285, %285 : vector<1x24xf32>
    %292 = arith.subf %290, %291 : vector<1x24xf32>
    %cst_102 = arith.constant 9.99999974E-6 : f32
    %293 = vector.broadcast %cst_102 : f32 to vector<1x24xf32>
    %294 = arith.addf %292, %293 : vector<1x24xf32>
    %295 = math.rsqrt %294 : vector<1x24xf32>
    %296 = arith.mulf %280, %295 : vector<1x24xf32>
    %297 = vector.broadcast %285 : vector<1x24xf32> to vector<8x24xf32>
    %298 = arith.subf %279, %297 : vector<8x24xf32>
    %299 = vector.broadcast %296 : vector<1x24xf32> to vector<8x24xf32>
    %300 = arith.mulf %298, %299 : vector<8x24xf32>
    %301 = vector.broadcast %281 : vector<1x24xf32> to vector<8x24xf32>
    %302 = arith.addf %300, %301 : vector<8x24xf32>
    %cst_103 = arith.constant 0.000000e+00 : f32
    %303 = vector.broadcast %cst_103 : f32 to vector<8x24xf32>
    %304 = arith.cmpf oge, %302, %303 : vector<8x24xf32>
    %cst_104 = arith.constant 1.000000e-01 : f32
    %305 = vector.broadcast %cst_104 : f32 to vector<8x24xf32>
    %306 = arith.mulf %305, %302 : vector<8x24xf32>
    %307 = arith.select %304, %302, %306 : vector<8x24xi1>, vector<8x24xf32>
    %c280 = arith.constant 280 : index
    %c0_105 = arith.constant 0 : index
    %308 = vector.load %arg3[%c280, %c0_105] : memref<376x128xf32, #tpu.memory_space<vmem>>, vector<24x32xf32>
    %cst_106 = arith.constant dense<0.000000e+00> : vector<8x32xf32>
    %309 = tpu.matmul %307, %308, %cst_106 {dimension_numbers = #tpu.dot_dimension_numbers<[1], [0], [0], [1], [0, 0, 1, 1], [], []>} : vector<8x24xf32>, vector<24x32xf32>, vector<8x32xf32> -> vector<8x32xf32>
    %c304 = arith.constant 304 : index
    %c0_107 = arith.constant 0 : index
    %310 = vector.load %arg3[%c304, %c0_107] : memref<376x128xf32, #tpu.memory_space<vmem>>, vector<1x32xf32>
    %311 = vector.broadcast %310 : vector<1x32xf32> to vector<8x32xf32>
    %312 = arith.addf %309, %311 : vector<8x32xf32>
    %313 = vector.extract_strided_slice %312 {offsets = [0, 0], sizes = [8, 16], strides = [1, 1]} : vector<8x32xf32> to vector<8x16xf32>
    %314 = vector.extract_strided_slice %312 {offsets = [0, 16], sizes = [8, 16], strides = [1, 1]} : vector<8x32xf32> to vector<8x16xf32>
    %cst_108 = arith.constant 0.000000e+00 : f32
    %315 = vector.broadcast %cst_108 : f32 to vector<8x16xf32>
    %316 = arith.maximumf %314, %315 : vector<8x16xf32>
    %317 = math.absf %314 : vector<8x16xf32>
    %cst_109 = arith.constant 0.000000e+00 : f32
    %318 = vector.broadcast %cst_109 : f32 to vector<8x16xf32>
    %319 = arith.subf %318, %317 : vector<8x16xf32>
    %320 = math.exp %319 : vector<8x16xf32>
    %cst_110 = arith.constant 1.000000e+00 : f32
    %321 = vector.broadcast %cst_110 : f32 to vector<8x16xf32>
    %322 = arith.addf %321, %320 : vector<8x16xf32>
    %323 = math.log %322 : vector<8x16xf32>
    %324 = arith.addf %316, %323 : vector<8x16xf32>
    %cst_111 = arith.constant 9.99999993E-9 : f32
    %325 = vector.broadcast %cst_111 : f32 to vector<8x16xf32>
    %326 = arith.addf %52, %325 : vector<8x16xf32>
    %cst_112 = arith.constant 9.99999993E-9 : f32
    %327 = vector.broadcast %cst_112 : f32 to vector<8x16xf32>
    %328 = arith.addf %324, %327 : vector<8x16xf32>
    %329 = arith.addf %326, %328 : vector<8x16xf32>
    %330 = tpu.reciprocal %329 {approx = true} : vector<8x16xf32> -> vector<8x16xf32>
    %331 = arith.mulf %326, %328 : vector<8x16xf32>
    %332 = arith.mulf %331, %330 : vector<8x16xf32>
    %333 = arith.mulf %41, %328 : vector<8x16xf32>
    %334 = arith.mulf %313, %326 : vector<8x16xf32>
    %335 = arith.addf %333, %334 : vector<8x16xf32>
    %336 = arith.mulf %335, %330 : vector<8x16xf32>
    %c0_113 = arith.constant 0 : index
    %c20 = arith.constant 20 : index
    %337 = vector.load %arg2[%c0_113, %c20] : memref<8x36xf32, #tpu.memory_space<vmem>>, vector<8x16xf32>
    %338 = math.sqrt %332 : vector<8x16xf32>
    %339 = arith.mulf %337, %338 : vector<8x16xf32>
    %340 = arith.addf %336, %339 : vector<8x16xf32>
    %cst_114 = arith.constant 9.99999993E-9 : f32
    %341 = vector.broadcast %cst_114 : f32 to vector<8x16xf32>
    %342 = arith.addf %332, %341 : vector<8x16xf32>
    %343 = math.log %342 : vector<8x16xf32>
    %cst_115 = arith.constant 5.000000e-01 : f32
    %344 = vector.broadcast %cst_115 : f32 to vector<8x16xf32>
    %345 = arith.mulf %344, %343 : vector<8x16xf32>
    %cst_116 = arith.constant -0.918938517 : f32
    %346 = vector.broadcast %cst_116 : f32 to vector<8x16xf32>
    %347 = arith.subf %346, %345 : vector<8x16xf32>
    %348 = arith.subf %340, %336 : vector<8x16xf32>
    %349 = arith.mulf %348, %348 : vector<8x16xf32>
    %cst_117 = arith.constant 2.000000e+00 : f32
    %350 = vector.broadcast %cst_117 : f32 to vector<8x16xf32>
    %351 = arith.mulf %350, %332 : vector<8x16xf32>
    %cst_118 = arith.constant 9.99999993E-9 : f32
    %352 = vector.broadcast %cst_118 : f32 to vector<8x16xf32>
    %353 = arith.addf %351, %352 : vector<8x16xf32>
    %354 = arith.divf %349, %353 : vector<8x16xf32>
    %355 = arith.subf %347, %354 : vector<8x16xf32>
    %cst_119 = arith.constant dense<0.000000e+00> : vector<8xf32>
    %356 = vector.multi_reduction <add>, %355, %cst_119 [1] : vector<8x16xf32> to vector<8xf32>
    %357 = vector.shape_cast %356 : vector<8xf32> to vector<8x1xf32>
    %cst_120 = arith.constant 9.99999993E-9 : f32
    %358 = vector.broadcast %cst_120 : f32 to vector<8x16xf32>
    %359 = arith.addf %324, %358 : vector<8x16xf32>
    %360 = math.log %359 : vector<8x16xf32>
    %cst_121 = arith.constant 5.000000e-01 : f32
    %361 = vector.broadcast %cst_121 : f32 to vector<8x16xf32>
    %362 = arith.mulf %361, %360 : vector<8x16xf32>
    %cst_122 = arith.constant -0.918938517 : f32
    %363 = vector.broadcast %cst_122 : f32 to vector<8x16xf32>
    %364 = arith.subf %363, %362 : vector<8x16xf32>
    %365 = arith.subf %340, %313 : vector<8x16xf32>
    %366 = arith.mulf %365, %365 : vector<8x16xf32>
    %cst_123 = arith.constant 2.000000e+00 : f32
    %367 = vector.broadcast %cst_123 : f32 to vector<8x16xf32>
    %368 = arith.mulf %367, %324 : vector<8x16xf32>
    %cst_124 = arith.constant 9.99999993E-9 : f32
    %369 = vector.broadcast %cst_124 : f32 to vector<8x16xf32>
    %370 = arith.addf %368, %369 : vector<8x16xf32>
    %371 = arith.divf %366, %370 : vector<8x16xf32>
    %372 = arith.subf %364, %371 : vector<8x16xf32>
    %cst_125 = arith.constant dense<0.000000e+00> : vector<8xf32>
    %373 = vector.multi_reduction <add>, %372, %cst_125 [1] : vector<8x16xf32> to vector<8xf32>
    %374 = vector.shape_cast %373 : vector<8xf32> to vector<8x1xf32>
    %375 = arith.subf %357, %374 : vector<8x1xf32>
    %c312 = arith.constant 312 : index
    %c0_126 = arith.constant 0 : index
    %376 = vector.load %arg3[%c312, %c0_126] : memref<376x128xf32, #tpu.memory_space<vmem>>, vector<16x32xf32>
    %cst_127 = arith.constant dense<0.000000e+00> : vector<8x32xf32>
    %377 = tpu.matmul %340, %376, %cst_127 {dimension_numbers = #tpu.dot_dimension_numbers<[1], [0], [0], [1], [0, 0, 1, 1], [], []>} : vector<8x16xf32>, vector<16x32xf32>, vector<8x32xf32> -> vector<8x32xf32>
    %c328 = arith.constant 328 : index
    %c0_128 = arith.constant 0 : index
    %378 = vector.load %arg3[%c328, %c0_128] : memref<376x128xf32, #tpu.memory_space<vmem>>, vector<1x32xf32>
    %379 = vector.broadcast %378 : vector<1x32xf32> to vector<8x32xf32>
    %380 = arith.addf %377, %379 : vector<8x32xf32>
    %cst_129 = arith.constant 0.000000e+00 : f32
    %381 = vector.broadcast %cst_129 : f32 to vector<8x32xf32>
    %382 = arith.maximumf %380, %381 : vector<8x32xf32>
    %c336 = arith.constant 336 : index
    %c0_130 = arith.constant 0 : index
    %383 = vector.load %arg3[%c336, %c0_130] : memref<376x128xf32, #tpu.memory_space<vmem>>, vector<32x32xf32>
    %cst_131 = arith.constant dense<0.000000e+00> : vector<8x32xf32>
    %384 = tpu.matmul %382, %383, %cst_131 {dimension_numbers = #tpu.dot_dimension_numbers<[1], [0], [0], [1], [0, 0, 1, 1], [], []>} : vector<8x32xf32>, vector<32x32xf32>, vector<8x32xf32> -> vector<8x32xf32>
    %c368 = arith.constant 368 : index
    %c0_132 = arith.constant 0 : index
    %385 = vector.load %arg3[%c368, %c0_132] : memref<376x128xf32, #tpu.memory_space<vmem>>, vector<1x32xf32>
    %386 = vector.broadcast %385 : vector<1x32xf32> to vector<8x32xf32>
    %387 = arith.addf %384, %386 : vector<8x32xf32>
    %cst_133 = arith.constant 5.000000e-01 : f32
    %388 = vector.broadcast %cst_133 : f32 to vector<8x32xf32>
    %389 = arith.mulf %388, %387 : vector<8x32xf32>
    %390 = math.tanh %389 : vector<8x32xf32>
    %cst_134 = arith.constant 1.000000e+00 : f32
    %391 = vector.broadcast %cst_134 : f32 to vector<8x32xf32>
    %392 = arith.addf %390, %391 : vector<8x32xf32>
    %cst_135 = arith.constant 5.000000e-01 : f32
    %393 = vector.broadcast %cst_135 : f32 to vector<8x32xf32>
    %394 = arith.mulf %393, %392 : vector<8x32xf32>
    %395 = arith.addf %173, %274 : vector<8x1xf32>
    %396 = arith.addf %395, %375 : vector<8x1xf32>
    %cst_136 = arith.constant 1.000000e+00 : f32
    %397 = vector.broadcast %cst_136 : f32 to vector<8x1xf32>
    %cst_137 = arith.constant dense<0.000000e+00> : vector<1xf32>
    %398 = vector.multi_reduction <add>, %173, %cst_137 [0] : vector<8x1xf32> to vector<1xf32>
    %399 = vector.shape_cast %398 : vector<1xf32> to vector<1x1xf32>
    %400 = vector.broadcast %399 : vector<1x1xf32> to vector<8x1xf32>
    %401 = arith.mulf %397, %400 : vector<8x1xf32>
    %cst_138 = arith.constant dense<0.000000e+00> : vector<1xf32>
    %402 = vector.multi_reduction <add>, %274, %cst_138 [0] : vector<8x1xf32> to vector<1xf32>
    %403 = vector.shape_cast %402 : vector<1xf32> to vector<1x1xf32>
    %404 = vector.broadcast %403 : vector<1x1xf32> to vector<8x1xf32>
    %405 = arith.mulf %397, %404 : vector<8x1xf32>
    %cst_139 = arith.constant dense<0.000000e+00> : vector<1xf32>
    %406 = vector.multi_reduction <add>, %375, %cst_139 [0] : vector<8x1xf32> to vector<1xf32>
    %407 = vector.shape_cast %406 : vector<1xf32> to vector<1x1xf32>
    %408 = vector.broadcast %407 : vector<1x1xf32> to vector<8x1xf32>
    %409 = arith.mulf %397, %408 : vector<8x1xf32>
    %410 = tpu.concatenate %394, %148, %239, %340, %396, %401, %405, %409 in 1 : vector<8x32xf32>, vector<8x8xf32>, vector<8x12xf32>, vector<8x16xf32>, vector<8x1xf32>, vector<8x1xf32>, vector<8x1xf32>, vector<8x1xf32> -> vector<8x72xf32>
    %cst_140 = arith.constant 0.000000e+00 : f32
    %411 = vector.broadcast %cst_140 : f32 to vector<8x56xf32>
    %412 = tpu.concatenate %410, %411 in 1 : vector<8x72xf32>, vector<8x56xf32> -> vector<8x128xf32>
    %c0_141 = arith.constant 0 : index
    %c0_142 = arith.constant 0 : index
    %413 = vector.load %arg4[%c0_141, %c0_142] : memref<8x128xf32, #tpu.memory_space<vmem>>, vector<8x128xf32>
    tpu.vector_store %arg4[%c0_141, %c0_142], %412 {strides = array<i32>} : memref<8x128xf32, #tpu.memory_space<vmem>>, vector<8x128xf32>,
    return
  }
  func.func @transform_0(%arg0: i32) -> (i32, i32) {
    %c0_i32 = arith.constant 0 : i32
    %c0_i32_0 = arith.constant 0 : i32
    %c0_i32_1 = arith.constant 0 : i32
    return %c0_i32, %c0_i32_0 : i32, i32
  }
  func.func @transform_1(%arg0: i32) -> (i32, i32) {
    %c0_i32 = arith.constant 0 : i32
    %c0_i32_0 = arith.constant 0 : i32
    %c0_i32_1 = arith.constant 0 : i32
    return %c0_i32, %c0_i32_0 : i32, i32
  }
  func.func @transform_2(%arg0: i32) -> (i32, i32) {
    %c0_i32 = arith.constant 0 : i32
    %c0_i32_0 = arith.constant 0 : i32
    %c0_i32_1 = arith.constant 0 : i32
    return %c0_i32, %c0_i32_0 : i32, i32
  }
  func.func @transform_3(%arg0: i32) -> (i32, i32) {
    %c0_i32 = arith.constant 0 : i32
    %c0_i32_0 = arith.constant 0 : i32
    %c0_i32_1 = arith.constant 0 : i32
    return %c0_i32, %c0_i32_0 : i32, i32
  }
}

</mosaic_0001>

<llo_original>
// kernel: forward.1
$region0: #{forward.1}
  #allocation0 [shape = 'u32[]', space=smem, size = 0x4, offset = 0x4, fixed_abs, tag = 'smem constant byte address 0x4 - core index']
  #allocation1 [shape = 'u32[144,128]{1,0:T(1,128)}', space=vmem, size = 0x12000, scoped, tag = 'internal scratch']
  %s0 = inlined_call_operand.hbm [shape: f32[8,32], index: 0, kind: input, shape index: {}]
  %s1 = inlined_call_operand.hbm [shape: f32[8,36], index: 1, kind: input, shape index: {}]
  %s2 = inlined_call_operand.hbm [shape: f32[376,128], index: 2, kind: input, shape index: {}]
  %s3 = inlined_call_operand.vmem [shape: f32[8,128], index: 3, kind: output, shape index: {}]
  %s4 = sld [smem:[#allocation0]]
  $region34: #{forward.1} parent=0
    _
  %s6 = ssub.s32 1, %s4
  %s7 = scalar_select 0, %s6, %s4
  $region1: #{forward.1} parent=0
    #allocation2 [shape = 'u8[4096]{0}', space=vmem, size = 0x1000, scoped, tag = 'input window, operand 0, single buffered']
    #allocation3 [shape = 's32[1]{0}', space=sflag, size = 0x4, scoped, tag = 'scoped memory for forward.1']
    #allocation4 [shape = 'u8[4096]{0}', space=vmem, size = 0x1000, scoped, tag = 'input window, operand 1, single buffered']
    #allocation5 [shape = 's32[1]{0}', space=sflag, size = 0x4, scoped, tag = 'scoped memory for forward.1']
    #allocation6 [shape = 'u8[192512]{0}', space=vmem, size = 0x2f000, scoped, tag = 'input window, operand 2, single buffered']
    %8 = vsyncpa [#allocation3], 0
    %9 = vsyncpa [#allocation5], 0
    // Predicated region
    $region2: #{forward.1} parent=1 // pred_check
      _
    $region3: #{forward.1} parent=1 // pred_check_branch
      %11 = sbr.rel (0) target = $region5
    $region4: #{forward.1} parent=1 // pred_region
      %s13 = ssub.s32 128, 128
      %14 = vsyncadd [#allocation3], %s13
      %s16 = sshll.u32 [#allocation2], 4
      %s17 = int_to_ptr.vmem [resolvable:$true] %s16
      %19 = dma.hbm_to_vmem [thread:$0]  %s0, 128, %s17, [#allocation3]
    $region5: #{forward.1} parent=1 // pred_fallthru
      _
    // Predicated region
    $region6: #{forward.1} parent=1 // pred_check
      _
    $region7: #{forward.1} parent=1 // pred_check_branch
      %21 = sbr.rel (0) target = $region9
    $region8: #{forward.1} parent=1 // pred_region
      %s23 = ssub.s32 128, 128
      %24 = vsyncadd [#allocation5], %s23
      %s26 = sshll.u32 [#allocation4], 4
      %s27 = int_to_ptr.vmem [resolvable:$true] %s26
      %29 = dma.hbm_to_vmem [thread:$0]  %s1, 128, %s27, [#allocation5]
    $region9: #{forward.1} parent=1 // pred_fallthru
      _
    // Predicated region
    $region10: #{forward.1} parent=1 // pred_check
      _
    $region11: #{forward.1} parent=1 // pred_check_branch
      %31 = sbr.rel (0) target = $region13
    $region12: #{forward.1} parent=1 // pred_region
      %s33 = ssub.s32 6016, 6016
      %34 = vsyncadd [#allocation5], %s33
      %s35 = sshll.u32 [#allocation6], 4
      %s36 = int_to_ptr.vmem [resolvable:$true] %s35
      %41 = dma.hbm_to_vmem [thread:$0]  %s2, 6016, %s36, [#allocation5], 128, 128, 8
    $region13: #{forward.1} parent=1 // pred_fallthru
      _
    // Predicated region
    $region14: #{forward.1} parent=1 // pred_check
      _
    $region15: #{forward.1} parent=1 // pred_check_branch
      %43 = sbr.rel (0) target = $region17
    $region16: #{forward.1} parent=1 // pred_region
      %44 = dma.done [#allocation3], 128
    $region17: #{forward.1} parent=1 // pred_fallthru
      _
    // Predicated region
    $region18: #{forward.1} parent=1 // pred_check
      _
    $region19: #{forward.1} parent=1 // pred_check_branch
      %46 = sbr.rel (0) target = $region21
    $region20: #{forward.1} parent=1 // pred_region
      %47 = dma.done [#allocation5], 128
    $region21: #{forward.1} parent=1 // pred_fallthru
      _
    // Predicated region
    $region22: #{forward.1} parent=1 // pred_check
      _
    $region23: #{forward.1} parent=1 // pred_check_branch
      %49 = sbr.rel (0) target = $region25
    $region24: #{forward.1} parent=1 // pred_region
      %50 = dma.done [#allocation5], 6016
    $region25: #{forward.1} parent=1 // pred_fallthru
      _
    %v51 = vld [vmem:[#allocation2] sm:$0xff]
    %v52 = vld [vmem:[#allocation6] sm:$0xff]
    %v53 = vld [vmem:[#allocation6 + $0x8] sm:$0xff]
    %v54 = vld [vmem:[#allocation6 + $0x10] sm:$0xff]
    %v55 = vld [vmem:[#allocation6 + $0x18] sm:$0xff]
    %v56 = vld [vmem:[#allocation6 + $0x20] sm:$0x1]
    %v57 = vlaneseq
    %v58 = vshrl.u32 %v57, 7
    %v59 = vsub.s32 0, %v58
    %v60 = vrot.slane %v56, %v59
    %vm61 = vcmask 261120
    %v63 = vsel %vm61, %v51, 0
    %65 = vmatprep.subr.mxu0 0.0
    %66 = vmatpush1.msra.mxu0 0.0
    %67 = vmatprep.subr.mxu0 0.0
    %68 = vmatpush1.msra.mxu0 0.0
    %69 = vmatprep.subr.mxu0 0.0
    %70 = vmatpush1.msra.mxu0 0.0
    %71 = vmatprep.subr.mxu0 0.0
    %72 = vmatpush1.msra.mxu0 0.0
    %73 = vmatprep.subr.mxu0 0.0
    %74 = vmatpush1.msra.mxu0 0.0
    %75 = vmatprep.subr.mxu0 0.0
    %76 = vmatpush1.msra.mxu0 0.0
    %77 = vmatprep.subr.mxu0 0.0
    %78 = vmatpush1.msra.mxu0 0.0
    %79 = vmatprep.subr.mxu0 0.0
    %80 = vmatpush1.msra.mxu0 0.0
    %81 = vmatprep.subr.mxu0 0.0
    %82 = vmatpush1.msra.mxu0 0.0
    %83 = vmatprep.subr.mxu0 0.0
    %84 = vmatpush1.msra.mxu0 0.0
    %85 = vmatprep.subr.mxu0 0.0
    %86 = vmatpush1.msra.mxu0 0.0
    %87 = vmatprep.subr.mxu0 0.0
    %88 = vmatpush1.msra.mxu0 0.0
    %89 = vmatprep.subr.mxu0 0.0
    %90 = vmatpush1.msra.mxu0 %v55
    %91 = vmatprep.subr.mxu0 0.0
    %92 = vmatpush1.msra.mxu0 %v54
    %93 = vmatprep.subr.mxu0 0.0
    %94 = vmatpush1.msra.mxu0 %v53
    %95 = vmatprep.subr.mxu0 0.0
    %96 = vmatpush1.msra.mxu0 %v52
    %97 = vmatprep.subr.mxu0 0.0
    %98 = vmatpush2.msra.mxu0 0.0
    %99 = vmatprep.subr.mxu0 0.0
    %100 = vmatpush2.msra.mxu0 0.0
    %101 = vmatprep.subr.mxu0 0.0
    %102 = vmatpush2.msra.mxu0 0.0
    %103 = vmatprep.subr.mxu0 0.0
    %104 = vmatpush2.msra.mxu0 0.0
    %105 = vmatprep.subr.mxu0 0.0
    %106 = vmatpush2.msra.mxu0 0.0
    %107 = vmatprep.subr.mxu0 0.0
    %108 = vmatpush2.msra.mxu0 0.0
    %109 = vmatprep.subr.mxu0 0.0
    %110 = vmatpush2.msra.mxu0 0.0
    %111 = vmatprep.subr.mxu0 0.0
    %112 = vmatpush2.msra.mxu0 0.0
    %113 = vmatprep.subr.mxu0 0.0
    %114 = vmatpush2.msra.mxu0 0.0
    %115 = vmatprep.subr.mxu0 0.0
    %116 = vmatpush2.msra.mxu0 0.0
    %117 = vmatprep.subr.mxu0 0.0
    %118 = vmatpush2.msra.mxu0 0.0
    %119 = vmatprep.subr.mxu0 0.0
    %120 = vmatpush2.msra.mxu0 0.0
    %121 = vmatprep.subr.mxu0 0.0
    %122 = vmatpush2.msra.mxu0 0.0
    %123 = vmatprep.subr.mxu0 0.0
    %124 = vmatpush2.msra.mxu0 0.0
    %125 = vmatprep.subr.mxu0 0.0
    %126 = vmatpush2.msra.mxu0 0.0
    %127 = vmatprep.subr.mxu0 0.0
    %128 = vmatpush2.msra.mxu0 0.0
    %129 = vmatprep.mubr.f32.mxu0 0.0
    %130 = vmatmul.mubr.f32.gmra.mxu0 %v63
    %v131 = vpop.f32.mrf.mxu0
    %v132 = vadd.f32 %v60, %v131
    %v133 = vpop.f32.mrf.mxu0
    %134 = vdwg.mxu0
    %v135 = vld [vmem:[#allocation6 + $0x28] sm:$0x1]
    %v136 = vld [vmem:[#allocation6 + $0x30] sm:$0x1]
    %v137 = vsel %vm61, %v132, 0.0
    %v138 = vrot.slane %v137, 4
    %v139 = vadd.f32 %v137, %v138
    %v140 = vrot.slane %v139, 2
    %v141 = vadd.f32 %v139, %v140
    %v142 = vrot.slane %v141, 1
    %v143 = vadd.f32 %v141, %v142
    %v144 = vrcp.pop 8.0
    %v145 = vmul.f32 %v143, %v144
    %v146 = vmul.f32 %v132, %v132
    %v147 = vsel %vm61, %v146, 0.0
    %v148 = vrot.slane %v147, 4
    %v149 = vadd.f32 %v147, %v148
    %v150 = vrot.slane %v149, 2
    %v151 = vadd.f32 %v149, %v150
    %v152 = vrot.slane %v151, 1
    %v153 = vadd.f32 %v151, %v152
    %v154 = vmul.f32 %v153, %v144
    %v155 = vmul.f32 %v145, %v145
    %v156 = vsub.f32 %v154, %v155
    %v157 = vadd.f32 %v156, 1e-05
    %v158 = vrsqrt.pop %v157
    %v159 = vmul.f32 %v135, %v158
    %v160 = vsub.f32 %v132, %v145
    %v161 = vlaneseq
    %v162 = vshrl.u32 %v161, 7
    %v163 = vsub.s32 0, %v162
    %v164 = vrot.slane %v159, %v163
    %v165 = vmul.f32 %v160, %v164
    %v166 = vlaneseq
    %v167 = vshrl.u32 %v166, 7
    %v168 = vsub.s32 0, %v167
    %v169 = vrot.slane %v136, %v168
    %v170 = vadd.f32 %v165, %v169
    %vm171 = vcmp.ge.f32.partialorder %v170, 0.0
    %v172 = vmul.f32 %v170, 0.1
    %v173 = vsel %vm171, %v170, %v172
    %v174 = vld [vmem:[#allocation6 + $0x38] sm:$0xff]
    %v175 = vld [vmem:[#allocation6 + $0x40] sm:$0xff]
    %v176 = vld [vmem:[#allocation6 + $0x48] sm:$0xff]
    %v177 = vld [vmem:[#allocation6 + $0x50] sm:$0xff]
    %v178 = vld [vmem:[#allocation6 + $0x58] sm:$0x1]
    %v179 = vlaneseq
    %v180 = vshrl.u32 %v179, 7
    %v181 = vsub.s32 0, %v180
    %v182 = vrot.slane %v178, %v181
    %v184 = vsel %vm61, %v173, 0
    %186 = vmatprep.subr.mxu0 0.0
    %187 = vmatpush1.msra.mxu0 0.0
    %188 = vmatprep.subr.mxu0 0.0
    %189 = vmatpush1.msra.mxu0 0.0
    %190 = vmatprep.subr.mxu0 0.0
    %191 = vmatpush1.msra.mxu0 0.0
    %192 = vmatprep.subr.mxu0 0.0
    %193 = vmatpush1.msra.mxu0 0.0
    %194 = vmatprep.subr.mxu0 0.0
    %195 = vmatpush1.msra.mxu0 0.0
    %196 = vmatprep.subr.mxu0 0.0
    %197 = vmatpush1.msra.mxu0 0.0
    %198 = vmatprep.subr.mxu0 0.0
    %199 = vmatpush1.msra.mxu0 0.0
    %200 = vmatprep.subr.mxu0 0.0
    %201 = vmatpush1.msra.mxu0 0.0
    %202 = vmatprep.subr.mxu0 0.0
    %203 = vmatpush1.msra.mxu0 0.0
    %204 = vmatprep.subr.mxu0 0.0
    %205 = vmatpush1.msra.mxu0 0.0
    %206 = vmatprep.subr.mxu0 0.0
    %207 = vmatpush1.msra.mxu0 0.0
    %208 = vmatprep.subr.mxu0 0.0
    %209 = vmatpush1.msra.mxu0 0.0
    %210 = vmatprep.subr.mxu0 0.0
    %211 = vmatpush1.msra.mxu0 %v177
    %212 = vmatprep.subr.mxu0 0.0
    %213 = vmatpush1.msra.mxu0 %v176
    %214 = vmatprep.subr.mxu0 0.0
    %215 = vmatpush1.msra.mxu0 %v175
    %216 = vmatprep.subr.mxu0 0.0
    %217 = vmatpush1.msra.mxu0 %v174
    %218 = vmatprep.subr.mxu0 0.0
    %219 = vmatpush2.msra.mxu0 0.0
    %220 = vmatprep.subr.mxu0 0.0
    %221 = vmatpush2.msra.mxu0 0.0
    %222 = vmatprep.subr.mxu0 0.0
    %223 = vmatpush2.msra.mxu0 0.0
    %224 = vmatprep.subr.mxu0 0.0
    %225 = vmatpush2.msra.mxu0 0.0
    %226 = vmatprep.subr.mxu0 0.0
    %227 = vmatpush2.msra.mxu0 0.0
    %228 = vmatprep.subr.mxu0 0.0
    %229 = vmatpush2.msra.mxu0 0.0
    %230 = vmatprep.subr.mxu0 0.0
    %231 = vmatpush2.msra.mxu0 0.0
    %232 = vmatprep.subr.mxu0 0.0
    %233 = vmatpush2.msra.mxu0 0.0
    %234 = vmatprep.subr.mxu0 0.0
    %235 = vmatpush2.msra.mxu0 0.0
    %236 = vmatprep.subr.mxu0 0.0
    %237 = vmatpush2.msra.mxu0 0.0
    %238 = vmatprep.subr.mxu0 0.0
    %239 = vmatpush2.msra.mxu0 0.0
    %240 = vmatprep.subr.mxu0 0.0
    %241 = vmatpush2.msra.mxu0 0.0
    %242 = vmatprep.subr.mxu0 0.0
    %243 = vmatpush2.msra.mxu0 0.0
    %244 = vmatprep.subr.mxu0 0.0
    %245 = vmatpush2.msra.mxu0 0.0
    %246 = vmatprep.subr.mxu0 0.0
    %247 = vmatpush2.msra.mxu0 0.0
    %248 = vmatprep.subr.mxu0 0.0
    %249 = vmatpush2.msra.mxu0 0.0
    %250 = vmatprep.mubr.f32.mxu0 0.0
    %251 = vmatmul.mubr.f32.gmra.mxu0 %v184
    %v252 = vpop.f32.mrf.mxu0
    %v253 = vadd.f32 %v182, %v252
    %v254 = vpop.f32.mrf.mxu0
    %255 = vdwg.mxu0
    %v256 = vmax.f32 %v253, 0.0
    %v257 = vand.u32 2147483647, %v253
    %v258 = vsub.f32 0.0, %v257
    %v259 = vmul.f32 %v258, 1.442695
    %v260 = vpow.pop %v259
    %v261 = vadd.f32 %v260, 1.0
    %v262 = vlog2.pop %v261
    %v263 = vmul.f32 %v262, 0.6931472
    %v264 = vadd.f32 %v256, %v263
    %v265 = vld [vmem:[#allocation6 + $0x60] sm:$0x1]
    %v266 = vld [vmem:[#allocation6 + $0x68] sm:$0x1]
    %vm267 = vcmask 195584
    %v268 = vsel %vm267, %v253, 0.0
    %v269 = vrot.slane %v268, 4
    %v270 = vadd.f32 %v268, %v269
    %v271 = vrot.slane %v270, 2
    %v272 = vadd.f32 %v270, %v271
    %v273 = vrot.slane %v272, 1
    %v274 = vadd.f32 %v272, %v273
    %v275 = vmul.f32 %v274, %v144
    %v276 = vmul.f32 %v253, %v253
    %v277 = vsel %vm267, %v276, 0.0
    %v278 = vrot.slane %v277, 4
    %v279 = vadd.f32 %v277, %v278
    %v280 = vrot.slane %v279, 2
    %v281 = vadd.f32 %v279, %v280
    %v282 = vrot.slane %v281, 1
    %v283 = vadd.f32 %v281, %v282
    %v284 = vmul.f32 %v283, %v144
    %v285 = vmul.f32 %v275, %v275
    %v286 = vsub.f32 %v284, %v285
    %v287 = vadd.f32 %v286, 1e-05
    %v288 = vrsqrt.pop %v287
    %v289 = vmul.f32 %v265, %v288
    %v290 = vsub.f32 %v253, %v275
    %v291 = vlaneseq
    %v292 = vshrl.u32 %v291, 7
    %v293 = vsub.s32 0, %v292
    %v294 = vrot.slane %v289, %v293
    %v295 = vmul.f32 %v290, %v294
    %v296 = vlaneseq
    %v297 = vshrl.u32 %v296, 7
    %v298 = vsub.s32 0, %v297
    %v299 = vrot.slane %v266, %v298
    %v300 = vadd.f32 %v295, %v299
    %vm301 = vcmp.ge.f32.partialorder %v300, 0.0
    %v302 = vmul.f32 %v300, 0.1
    %v303 = vsel %vm301, %v300, %v302
    %v304 = vld [vmem:[#allocation6 + $0x70] sm:$0xff]
    %v305 = vld [vmem:[#allocation6 + $0x78] sm:$0xff]
    %v306 = vld [vmem:[#allocation6 + $0x80] sm:$0xff]
    %v307 = vld [vmem:[#allocation6 + $0x88] sm:$0x1]
    %v308 = vlaneseq
    %v309 = vshrl.u32 %v308, 7
    %v310 = vsub.s32 0, %v309
    %v311 = vrot.slane %v307, %v310
    %v313 = vsel %vm267, %v303, 0
    %315 = vmatprep.subr.mxu0 0.0
    %316 = vmatpush1.msra.mxu0 0.0
    %317 = vmatprep.subr.mxu0 0.0
    %318 = vmatpush1.msra.mxu0 0.0
    %319 = vmatprep.subr.mxu0 0.0
    %320 = vmatpush1.msra.mxu0 0.0
    %321 = vmatprep.subr.mxu0 0.0
    %322 = vmatpush1.msra.mxu0 0.0
    %323 = vmatprep.subr.mxu0 0.0
    %324 = vmatpush1.msra.mxu0 0.0
    %325 = vmatprep.subr.mxu0 0.0
    %326 = vmatpush1.msra.mxu0 0.0
    %327 = vmatprep.subr.mxu0 0.0
    %328 = vmatpush1.msra.mxu0 0.0
    %329 = vmatprep.subr.mxu0 0.0
    %330 = vmatpush1.msra.mxu0 0.0
    %331 = vmatprep.subr.mxu0 0.0
    %332 = vmatpush1.msra.mxu0 0.0
    %333 = vmatprep.subr.mxu0 0.0
    %334 = vmatpush1.msra.mxu0 0.0
    %335 = vmatprep.subr.mxu0 0.0
    %336 = vmatpush1.msra.mxu0 0.0
    %337 = vmatprep.subr.mxu0 0.0
    %338 = vmatpush1.msra.mxu0 0.0
    %339 = vmatprep.subr.mxu0 0.0
    %340 = vmatpush1.msra.mxu0 0.0
    %341 = vmatprep.subr.mxu0 0.0
    %342 = vmatpush1.msra.mxu0 %v306
    %343 = vmatprep.subr.mxu0 0.0
    %344 = vmatpush1.msra.mxu0 %v305
    %345 = vmatprep.subr.mxu0 0.0
    %346 = vmatpush1.msra.mxu0 %v304
    %347 = vmatprep.subr.mxu0 0.0
    %348 = vmatpush2.msra.mxu0 0.0
    %349 = vmatprep.subr.mxu0 0.0
    %350 = vmatpush2.msra.mxu0 0.0
    %351 = vmatprep.subr.mxu0 0.0
    %352 = vmatpush2.msra.mxu0 0.0
    %353 = vmatprep.subr.mxu0 0.0
    %354 = vmatpush2.msra.mxu0 0.0
    %355 = vmatprep.subr.mxu0 0.0
    %356 = vmatpush2.msra.mxu0 0.0
    %357 = vmatprep.subr.mxu0 0.0
    %358 = vmatpush2.msra.mxu0 0.0
    %359 = vmatprep.subr.mxu0 0.0
    %360 = vmatpush2.msra.mxu0 0.0
    %361 = vmatprep.subr.mxu0 0.0
    %362 = vmatpush2.msra.mxu0 0.0
    %363 = vmatprep.subr.mxu0 0.0
    %364 = vmatpush2.msra.mxu0 0.0
    %365 = vmatprep.subr.mxu0 0.0
    %366 = vmatpush2.msra.mxu0 0.0
    %367 = vmatprep.subr.mxu0 0.0
    %368 = vmatpush2.msra.mxu0 0.0
    %369 = vmatprep.subr.mxu0 0.0
    %370 = vmatpush2.msra.mxu0 0.0
    %371 = vmatprep.subr.mxu0 0.0
    %372 = vmatpush2.msra.mxu0 0.0
    %373 = vmatprep.subr.mxu0 0.0
    %374 = vmatpush2.msra.mxu0 0.0
    %375 = vmatprep.subr.mxu0 0.0
    %376 = vmatpush2.msra.mxu0 0.0
    %377 = vmatprep.subr.mxu0 0.0
    %378 = vmatpush2.msra.mxu0 0.0
    %379 = vmatprep.mubr.f32.mxu0 0.0
    %380 = vmatmul.mubr.f32.gmra.mxu0 %v313
    %v381 = vpop.f32.mrf.mxu0
    %v382 = vadd.f32 %v311, %v381
    %v383 = vpop.f32.mrf.mxu0
    %384 = vdwg.mxu0
    %v385 = vmax.f32 %v382, 0.0
    %v386 = vand.u32 2147483647, %v382
    %v387 = vsub.f32 0.0, %v386
    %v388 = vmul.f32 %v387, 1.442695
    %v389 = vpow.pop %v388
    %v390 = vadd.f32 %v389, 1.0
    %v391 = vlog2.pop %v390
    %v392 = vmul.f32 %v391, 0.6931472
    %v393 = vadd.f32 %v385, %v392
    %v394 = vld [vmem:[#allocation6 + $0x90] sm:$0x1]
    %v395 = vld [vmem:[#allocation6 + $0x98] sm:$0x1]
    %vm396 = vcmask 130048
    %v397 = vsel %vm396, %v382, 0.0
    %v398 = vrot.slane %v397, 4
    %v399 = vadd.f32 %v397, %v398
    %v400 = vrot.slane %v399, 2
    %v401 = vadd.f32 %v399, %v400
    %v402 = vrot.slane %v401, 1
    %v403 = vadd.f32 %v401, %v402
    %v404 = vmul.f32 %v403, %v144
    %v405 = vmul.f32 %v382, %v382
    %v406 = vsel %vm396, %v405, 0.0
    %v407 = vrot.slane %v406, 4
    %v408 = vadd.f32 %v406, %v407
    %v409 = vrot.slane %v408, 2
    %v410 = vadd.f32 %v408, %v409
    %v411 = vrot.slane %v410, 1
    %v412 = vadd.f32 %v410, %v411
    %v413 = vmul.f32 %v412, %v144
    %v414 = vmul.f32 %v404, %v404
    %v415 = vsub.f32 %v413, %v414
    %v416 = vadd.f32 %v415, 1e-05
    %v417 = vrsqrt.pop %v416
    %v418 = vmul.f32 %v394, %v417
    %v419 = vsub.f32 %v382, %v404
    %v420 = vlaneseq
    %v421 = vshrl.u32 %v420, 7
    %v422 = vsub.s32 0, %v421
    %v423 = vrot.slane %v418, %v422
    %v424 = vmul.f32 %v419, %v423
    %v425 = vlaneseq
    %v426 = vshrl.u32 %v425, 7
    %v427 = vsub.s32 0, %v426
    %v428 = vrot.slane %v395, %v427
    %v429 = vadd.f32 %v424, %v428
    %vm430 = vcmp.ge.f32.partialorder %v429, 0.0
    %v431 = vmul.f32 %v429, 0.1
    %v432 = vsel %vm430, %v429, %v431
    %v433 = vld [vmem:[#allocation6 + $0xa0] sm:$0xff]
    %v434 = vld [vmem:[#allocation6 + $0xa8] sm:$0xff]
    %v435 = vld [vmem:[#allocation6 + $0xb0] sm:$0x1]
    %v436 = vlaneseq
    %v437 = vshrl.u32 %v436, 7
    %v438 = vsub.s32 0, %v437
    %v439 = vrot.slane %v435, %v438
    %v441 = vsel %vm396, %v432, 0
    %443 = vmatprep.subr.mxu0 0.0
    %444 = vmatpush1.msra.mxu0 0.0
    %445 = vmatprep.subr.mxu0 0.0
    %446 = vmatpush1.msra.mxu0 0.0
    %447 = vmatprep.subr.mxu0 0.0
    %448 = vmatpush1.msra.mxu0 0.0
    %449 = vmatprep.subr.mxu0 0.0
    %450 = vmatpush1.msra.mxu0 0.0
    %451 = vmatprep.subr.mxu0 0.0
    %452 = vmatpush1.msra.mxu0 0.0
    %453 = vmatprep.subr.mxu0 0.0
    %454 = vmatpush1.msra.mxu0 0.0
    %455 = vmatprep.subr.mxu0 0.0
    %456 = vmatpush1.msra.mxu0 0.0
    %457 = vmatprep.subr.mxu0 0.0
    %458 = vmatpush1.msra.mxu0 0.0
    %459 = vmatprep.subr.mxu0 0.0
    %460 = vmatpush1.msra.mxu0 0.0
    %461 = vmatprep.subr.mxu0 0.0
    %462 = vmatpush1.msra.mxu0 0.0
    %463 = vmatprep.subr.mxu0 0.0
    %464 = vmatpush1.msra.mxu0 0.0
    %465 = vmatprep.subr.mxu0 0.0
    %466 = vmatpush1.msra.mxu0 0.0
    %467 = vmatprep.subr.mxu0 0.0
    %468 = vmatpush1.msra.mxu0 0.0
    %469 = vmatprep.subr.mxu0 0.0
    %470 = vmatpush1.msra.mxu0 0.0
    %471 = vmatprep.subr.mxu0 0.0
    %472 = vmatpush1.msra.mxu0 %v434
    %473 = vmatprep.subr.mxu0 0.0
    %474 = vmatpush1.msra.mxu0 %v433
    %475 = vmatprep.subr.mxu0 0.0
    %476 = vmatpush2.msra.mxu0 0.0
    %477 = vmatprep.subr.mxu0 0.0
    %478 = vmatpush2.msra.mxu0 0.0
    %479 = vmatprep.subr.mxu0 0.0
    %480 = vmatpush2.msra.mxu0 0.0
    %481 = vmatprep.subr.mxu0 0.0
    %482 = vmatpush2.msra.mxu0 0.0
    %483 = vmatprep.subr.mxu0 0.0
    %484 = vmatpush2.msra.mxu0 0.0
    %485 = vmatprep.subr.mxu0 0.0
    %486 = vmatpush2.msra.mxu0 0.0
    %487 = vmatprep.subr.mxu0 0.0
    %488 = vmatpush2.msra.mxu0 0.0
    %489 = vmatprep.subr.mxu0 0.0
    %490 = vmatpush2.msra.mxu0 0.0
    %491 = vmatprep.subr.mxu0 0.0
    %492 = vmatpush2.msra.mxu0 0.0
    %493 = vmatprep.subr.mxu0 0.0
    %494 = vmatpush2.msra.mxu0 0.0
    %495 = vmatprep.subr.mxu0 0.0
    %496 = vmatpush2.msra.mxu0 0.0
    %497 = vmatprep.subr.mxu0 0.0
    %498 = vmatpush2.msra.mxu0 0.0
    %499 = vmatprep.subr.mxu0 0.0
    %500 = vmatpush2.msra.mxu0 0.0
    %501 = vmatprep.subr.mxu0 0.0
    %502 = vmatpush2.msra.mxu0 0.0
    %503 = vmatprep.subr.mxu0 0.0
    %504 = vmatpush2.msra.mxu0 0.0
    %505 = vmatprep.subr.mxu0 0.0
    %506 = vmatpush2.msra.mxu0 0.0
    %507 = vmatprep.mubr.f32.mxu0 0.0
    %508 = vmatmul.mubr.f32.gmra.mxu0 %v441
    %v509 = vpop.f32.mrf.mxu0
    %v510 = vadd.f32 %v439, %v509
    %v511 = vpop.f32.mrf.mxu0
    %512 = vdwg.mxu0
    %v513 = vmax.f32 %v510, 0.0
    %v514 = vand.u32 2147483647, %v510
    %v515 = vsub.f32 0.0, %v514
    %v516 = vmul.f32 %v515, 1.442695
    %v517 = vpow.pop %v516
    %v518 = vadd.f32 %v517, 1.0
    %v519 = vlog2.pop %v518
    %v520 = vmul.f32 %v519, 0.6931472
    %v521 = vadd.f32 %v513, %v520
    %v522 = vld [vmem:[#allocation4] sm:$0xff]
    %v523 = vrsqrt.pop %v521
    %v524 = vmul.f32 %v521, %v523
    %vm525 = vcmp.eq.f32.partialorder %v521, inf
    %v526 = vsel %vm525, %v521, %v524
    %vm527 = vcmp.eq.f32.partialorder %v521, 0.0
    %v528 = vand.u32 %v521, 2147483648
    %v529 = vsel %vm527, %v528, %v526
    %531 = vrot.lane.b32.xlu0 %v529, 120
    %v532 = vpop.permute.xlu0 %531
    %v534 = vmul.f32 %v522, %v532
    %v535 = vadd.f32 %v510, %v534
    %v536 = vadd.f32 %v521, 1e-08
    %v537 = vlog2.pop %v536
    %v538 = vmul.f32 %v537, 0.6931472
    %v539 = vmul.f32 %v538, 0.5
    %v540 = vsub.f32 -0.9189385, %v539
    %v541 = vsub.f32 %v535, %v510
    %v542 = vmul.f32 %v541, %v541
    %v543 = vmul.f32 %v521, 2.0
    %v544 = vadd.f32 %v543, 1e-08
    %546 = vrot.lane.b32.xlu0 %v544, 120
    %v547 = vpop.permute.xlu0 %546
    %v549 = vrcp.pop %v547
    %v550 = vmul.f32 %v542, %v549
    %552 = vrot.lane.b32.xlu0 %v550, 8
    %v553 = vpop.permute.xlu0 %552
    %v555 = vsub.f32 %v540, %v553
    %557 = vrot.lane.b32.xlu0 %v555, 120
    %v558 = vpop.permute.xlu0 %557
    %vm560 = vcmask 64512
    %v561 = vsel %vm560, %v558, 0.0
    %562 = vadd.xlane.f32.xlu0 %v561
    %v563 = vpop.xlane.xlu0 %562
    %v564 = vmul.f32 %v535, 0.5
    %v565 = vmul.f32 %v564, %v535
    %v566 = vsub.f32 -0.9189385, %v565
    %v567 = vsel %vm560, %v566, 0.0
    %568 = vadd.xlane.f32.xlu0 %v567
    %v569 = vpop.xlane.xlu0 %568
    %v570 = vsub.f32 %v563, %v569
    %v571 = vld [vmem:[#allocation6 + $0xb8] sm:$0xff]
    %v572 = vld [vmem:[#allocation6 + $0xc0] sm:$0x1]
    %v573 = vlaneseq
    %v574 = vshrl.u32 %v573, 7
    %v575 = vsub.s32 0, %v574
    %v576 = vrot.slane %v572, %v575
    %v578 = vsel %vm560, %v535, 0
    %580 = vmatprep.subr.mxu0 0.0
    %581 = vmatpush1.msra.mxu0 0.0
    %582 = vmatprep.subr.mxu0 0.0
    %583 = vmatpush1.msra.mxu0 0.0
    %584 = vmatprep.subr.mxu0 0.0
    %585 = vmatpush1.msra.mxu0 0.0
    %586 = vmatprep.subr.mxu0 0.0
    %587 = vmatpush1.msra.mxu0 0.0
    %588 = vmatprep.subr.mxu0 0.0
    %589 = vmatpush1.msra.mxu0 0.0
    %590 = vmatprep.subr.mxu0 0.0
    %591 = vmatpush1.msra.mxu0 0.0
    %592 = vmatprep.subr.mxu0 0.0
    %593 = vmatpush1.msra.mxu0 0.0
    %594 = vmatprep.subr.mxu0 0.0
    %595 = vmatpush1.msra.mxu0 0.0
    %596 = vmatprep.subr.mxu0 0.0
    %597 = vmatpush1.msra.mxu0 0.0
    %598 = vmatprep.subr.mxu0 0.0
    %599 = vmatpush1.msra.mxu0 0.0
    %600 = vmatprep.subr.mxu0 0.0
    %601 = vmatpush1.msra.mxu0 0.0
    %602 = vmatprep.subr.mxu0 0.0
    %603 = vmatpush1.msra.mxu0 0.0
    %604 = vmatprep.subr.mxu0 0.0
    %605 = vmatpush1.msra.mxu0 0.0
    %606 = vmatprep.subr.mxu0 0.0
    %607 = vmatpush1.msra.mxu0 0.0
    %608 = vmatprep.subr.mxu0 0.0
    %609 = vmatpush1.msra.mxu0 0.0
    %610 = vmatprep.subr.mxu0 0.0
    %611 = vmatpush1.msra.mxu0 %v571
    %612 = vmatprep.subr.mxu0 0.0
    %613 = vmatpush2.msra.mxu0 0.0
    %614 = vmatprep.subr.mxu0 0.0
    %615 = vmatpush2.msra.mxu0 0.0
    %616 = vmatprep.subr.mxu0 0.0
    %617 = vmatpush2.msra.mxu0 0.0
    %618 = vmatprep.subr.mxu0 0.0
    %619 = vmatpush2.msra.mxu0 0.0
    %620 = vmatprep.subr.mxu0 0.0
    %621 = vmatpush2.msra.mxu0 0.0
    %622 = vmatprep.subr.mxu0 0.0
    %623 = vmatpush2.msra.mxu0 0.0
    %624 = vmatprep.subr.mxu0 0.0
    %625 = vmatpush2.msra.mxu0 0.0
    %626 = vmatprep.subr.mxu0 0.0
    %627 = vmatpush2.msra.mxu0 0.0
    %628 = vmatprep.subr.mxu0 0.0
    %629 = vmatpush2.msra.mxu0 0.0
    %630 = vmatprep.subr.mxu0 0.0
    %631 = vmatpush2.msra.mxu0 0.0
    %632 = vmatprep.subr.mxu0 0.0
    %633 = vmatpush2.msra.mxu0 0.0
    %634 = vmatprep.subr.mxu0 0.0
    %635 = vmatpush2.msra.mxu0 0.0
    %636 = vmatprep.subr.mxu0 0.0
    %637 = vmatpush2.msra.mxu0 0.0
    %638 = vmatprep.subr.mxu0 0.0
    %639 = vmatpush2.msra.mxu0 0.0
    %640 = vmatprep.subr.mxu0 0.0
    %641 = vmatpush2.msra.mxu0 0.0
    %642 = vmatprep.subr.mxu0 0.0
    %643 = vmatpush2.msra.mxu0 0.0
    %644 = vmatprep.mubr.f32.mxu0 0.0
    %645 = vmatmul.mubr.f32.gmra.mxu0 %v578
    %v646 = vpop.f32.mrf.mxu0
    %v647 = vadd.f32 %v576, %v646
    %v648 = vpop.f32.mrf.mxu0
    %649 = vdwg.mxu0
    %v650 = vld [vmem:[#allocation6 + $0xc8] sm:$0x1]
    %v651 = vld [vmem:[#allocation6 + $0xd0] sm:$0x1]
    %v652 = vsel %vm396, %v647, 0.0
    %v653 = vrot.slane %v652, 4
    %v654 = vadd.f32 %v652, %v653
    %v655 = vrot.slane %v654, 2
    %v656 = vadd.f32 %v654, %v655
    %v657 = vrot.slane %v656, 1
    %v658 = vadd.f32 %v656, %v657
    %v659 = vmul.f32 %v658, %v144
    %v660 = vmul.f32 %v647, %v647
    %v661 = vsel %vm396, %v660, 0.0
    %v662 = vrot.slane %v661, 4
    %v663 = vadd.f32 %v661, %v662
    %v664 = vrot.slane %v663, 2
    %v665 = vadd.f32 %v663, %v664
    %v666 = vrot.slane %v665, 1
    %v667 = vadd.f32 %v665, %v666
    %v668 = vmul.f32 %v667, %v144
    %v669 = vmul.f32 %v659, %v659
    %v670 = vsub.f32 %v668, %v669
    %v671 = vadd.f32 %v670, 1e-05
    %v672 = vrsqrt.pop %v671
    %v673 = vmul.f32 %v650, %v672
    %v674 = vsub.f32 %v647, %v659
    %v675 = vlaneseq
    %v676 = vshrl.u32 %v675, 7
    %v677 = vsub.s32 0, %v676
    %v678 = vrot.slane %v673, %v677
    %v679 = vmul.f32 %v674, %v678
    %v680 = vlaneseq
    %v681 = vshrl.u32 %v680, 7
    %v682 = vsub.s32 0, %v681
    %v683 = vrot.slane %v651, %v682
    %v684 = vadd.f32 %v679, %v683
    %vm685 = vcmp.ge.f32.partialorder %v684, 0.0
    %v686 = vmul.f32 %v684, 0.1
    %v687 = vsel %vm685, %v684, %v686
    %v688 = vld [vmem:[#allocation6 + $0xd8] sm:$0xff]
    %v689 = vld [vmem:[#allocation6 + $0xe0] sm:$0xff]
    %v690 = vld [vmem:[#allocation6 + $0xe8] sm:$0x1]
    %v691 = vlaneseq
    %v692 = vshrl.u32 %v691, 7
    %v693 = vsub.s32 0, %v692
    %v694 = vrot.slane %v690, %v693
    %v696 = vsel %vm396, %v687, 0
    %698 = vmatprep.subr.mxu0 0.0
    %699 = vmatpush1.msra.mxu0 0.0
    %700 = vmatprep.subr.mxu0 0.0
    %701 = vmatpush1.msra.mxu0 0.0
    %702 = vmatprep.subr.mxu0 0.0
    %703 = vmatpush1.msra.mxu0 0.0
    %704 = vmatprep.subr.mxu0 0.0
    %705 = vmatpush1.msra.mxu0 0.0
    %706 = vmatprep.subr.mxu0 0.0
    %707 = vmatpush1.msra.mxu0 0.0
    %708 = vmatprep.subr.mxu0 0.0
    %709 = vmatpush1.msra.mxu0 0.0
    %710 = vmatprep.subr.mxu0 0.0
    %711 = vmatpush1.msra.mxu0 0.0
    %712 = vmatprep.subr.mxu0 0.0
    %713 = vmatpush1.msra.mxu0 0.0
    %714 = vmatprep.subr.mxu0 0.0
    %715 = vmatpush1.msra.mxu0 0.0
    %716 = vmatprep.subr.mxu0 0.0
    %717 = vmatpush1.msra.mxu0 0.0
    %718 = vmatprep.subr.mxu0 0.0
    %719 = vmatpush1.msra.mxu0 0.0
    %720 = vmatprep.subr.mxu0 0.0
    %721 = vmatpush1.msra.mxu0 0.0
    %722 = vmatprep.subr.mxu0 0.0
    %723 = vmatpush1.msra.mxu0 0.0
    %724 = vmatprep.subr.mxu0 0.0
    %725 = vmatpush1.msra.mxu0 0.0
    %726 = vmatprep.subr.mxu0 0.0
    %727 = vmatpush1.msra.mxu0 %v689
    %728 = vmatprep.subr.mxu0 0.0
    %729 = vmatpush1.msra.mxu0 %v688
    %730 = vmatprep.subr.mxu0 0.0
    %731 = vmatpush2.msra.mxu0 0.0
    %732 = vmatprep.subr.mxu0 0.0
    %733 = vmatpush2.msra.mxu0 0.0
    %734 = vmatprep.subr.mxu0 0.0
    %735 = vmatpush2.msra.mxu0 0.0
    %736 = vmatprep.subr.mxu0 0.0
    %737 = vmatpush2.msra.mxu0 0.0
    %738 = vmatprep.subr.mxu0 0.0
    %739 = vmatpush2.msra.mxu0 0.0
    %740 = vmatprep.subr.mxu0 0.0
    %741 = vmatpush2.msra.mxu0 0.0
    %742 = vmatprep.subr.mxu0 0.0
    %743 = vmatpush2.msra.mxu0 0.0
    %744 = vmatprep.subr.mxu0 0.0
    %745 = vmatpush2.msra.mxu0 0.0
    %746 = vmatprep.subr.mxu0 0.0
    %747 = vmatpush2.msra.mxu0 0.0
    %748 = vmatprep.subr.mxu0 0.0
    %749 = vmatpush2.msra.mxu0 0.0
    %750 = vmatprep.subr.mxu0 0.0
    %751 = vmatpush2.msra.mxu0 0.0
    %752 = vmatprep.subr.mxu0 0.0
    %753 = vmatpush2.msra.mxu0 0.0
    %754 = vmatprep.subr.mxu0 0.0
    %755 = vmatpush2.msra.mxu0 0.0
    %756 = vmatprep.subr.mxu0 0.0
    %757 = vmatpush2.msra.mxu0 0.0
    %758 = vmatprep.subr.mxu0 0.0
    %759 = vmatpush2.msra.mxu0 0.0
    %760 = vmatprep.subr.mxu0 0.0
    %761 = vmatpush2.msra.mxu0 0.0
    %762 = vmatprep.mubr.f32.mxu0 0.0
    %763 = vmatmul.mubr.f32.gmra.mxu0 %v696
    %v764 = vpop.f32.mrf.mxu0
    %v765 = vadd.f32 %v694, %v764
    %v766 = vpop.f32.mrf.mxu0
    %767 = vdwg.mxu0
    %v768 = vmax.f32 %v765, 0.0
    %v769 = vand.u32 2147483647, %v765
    %v770 = vsub.f32 0.0, %v769
    %v771 = vmul.f32 %v770, 1.442695
    %v772 = vpow.pop %v771
    %v773 = vadd.f32 %v772, 1.0
    %v774 = vlog2.pop %v773
    %v775 = vmul.f32 %v774, 0.6931472
    %v776 = vadd.f32 %v768, %v775
    %v777 = vadd.f32 %v393, 1e-08
    %v778 = vadd.f32 %v776, 1e-08
    %780 = vrot.lane.b32.xlu0 %v778, 16
    %v781 = vpop.permute.xlu0 %780
    %v783 = vadd.f32 %v777, %v781
    %v784 = vrcp.pop %v783
    %v785 = vmul.f32 %v777, %v781
    %v786 = vmul.f32 %v785, %v784
    %787 = vrot.lane.b32.xlu0 %v778, 4
    %v788 = vpop.permute.xlu0 %787
    %v790 = vmul.f32 %v382, %v788
    %792 = vrot.lane.b32.xlu0 %v777, 100
    %v793 = vpop.permute.xlu0 %792
    %v795 = vmul.f32 %v765, %v793
    %797 = vrot.lane.b32.xlu0 %v795, 16
    %v798 = vpop.permute.xlu0 %797
    %v800 = vadd.f32 %v790, %v798
    %802 = vrot.lane.b32.xlu0 %v784, 116
    %v803 = vpop.permute.xlu0 %802
    %v805 = vmul.f32 %v800, %v803
    %v806 = vrsqrt.pop %v786
    %v807 = vmul.f32 %v786, %v806
    %vm808 = vcmp.eq.f32.partialorder %v786, inf
    %v809 = vsel %vm808, %v786, %v807
    %vm810 = vcmp.eq.f32.partialorder %v786, 0.0
    %v811 = vand.u32 %v786, 2147483648
    %v812 = vsel %vm810, %v811, %v809
    %814 = vrot.lane.b32.xlu0 %v812, 108
    %v815 = vpop.permute.xlu0 %814
    %v817 = vmul.f32 %v522, %v815
    %819 = vrot.lane.b32.xlu0 %v817, 8
    %v820 = vpop.permute.xlu0 %819
    %v822 = vadd.f32 %v805, %v820
    %v823 = vadd.f32 %v786, 1e-08
    %v824 = vlog2.pop %v823
    %v825 = vmul.f32 %v824, 0.6931472
    %v826 = vmul.f32 %v825, 0.5
    %v827 = vsub.f32 -0.9189385, %v826
    %v828 = vsub.f32 %v822, %v805
    %v829 = vmul.f32 %v828, %v828
    %v830 = vmul.f32 %v786, 2.0
    %v831 = vadd.f32 %v830, 1e-08
    %833 = vrot.lane.b32.xlu0 %v831, 116
    %v834 = vpop.permute.xlu0 %833
    %v836 = vrcp.pop %v834
    %v837 = vmul.f32 %v829, %v836
    %839 = vrot.lane.b32.xlu0 %v837, 12
    %v840 = vpop.permute.xlu0 %839
    %v842 = vsub.f32 %v827, %v840
    %844 = vrot.lane.b32.xlu0 %v842, 100
    %v845 = vpop.permute.xlu0 %844
    %vm847 = vcmask 97280
    %v848 = vsel %vm847, %v845, 0.0
    %849 = vadd.xlane.f32.xlu0 %v848
    %v850 = vpop.xlane.xlu0 %849
    %v851 = vlog2.pop %v778
    %v852 = vmul.f32 %v851, 0.6931472
    %v853 = vmul.f32 %v852, 0.5
    %v854 = vsub.f32 -0.9189385, %v853
    %856 = vrot.lane.b32.xlu0 %v765, 16
    %v857 = vpop.permute.xlu0 %856
    %v859 = vsub.f32 %v822, %v857
    %v860 = vmul.f32 %v859, %v859
    %v861 = vmul.f32 %v776, 2.0
    %v862 = vadd.f32 %v861, 1e-08
    %864 = vrot.lane.b32.xlu0 %v862, 4
    %v865 = vpop.permute.xlu0 %864
    %v867 = vrcp.pop %v865
    %v868 = vmul.f32 %v860, %v867
    %870 = vrot.lane.b32.xlu0 %v868, 124
    %v871 = vpop.permute.xlu0 %870
    %v873 = vsub.f32 %v854, %v871
    %875 = vrot.lane.b32.xlu0 %v873, 116
    %v876 = vpop.permute.xlu0 %875
    %v878 = vsel %vm847, %v876, 0.0
    %879 = vadd.xlane.f32.xlu0 %v878
    %v880 = vpop.xlane.xlu0 %879
    %v881 = vsub.f32 %v850, %v880
    %v882 = vld [vmem:[#allocation6 + $0xf0] sm:$0xff]
    %v883 = vld [vmem:[#allocation6 + $0xf8] sm:$0xf]
    %v884 = vld [vmem:[#allocation6 + $0x100] sm:$0x1]
    %v885 = vlaneseq
    %v886 = vshrl.u32 %v885, 7
    %v887 = vsub.s32 0, %v886
    %v888 = vrot.slane %v884, %v887
    %890 = vrot.lane.b32.xlu0 %v822, 112
    %v891 = vpop.permute.xlu0 %890
    %v892 = vsel %vm847, %v891, 0
    %vm894 = vcmask 1043456
    %v896 = vsel %vm894, %v883, 0
    %898 = vmatprep.subr.mxu0 0.0
    %899 = vmatpush1.msra.mxu0 0.0
    %900 = vmatprep.subr.mxu0 0.0
    %901 = vmatpush1.msra.mxu0 0.0
    %902 = vmatprep.subr.mxu0 0.0
    %903 = vmatpush1.msra.mxu0 0.0
    %904 = vmatprep.subr.mxu0 0.0
    %905 = vmatpush1.msra.mxu0 0.0
    %906 = vmatprep.subr.mxu0 0.0
    %907 = vmatpush1.msra.mxu0 0.0
    %908 = vmatprep.subr.mxu0 0.0
    %909 = vmatpush1.msra.mxu0 0.0
    %910 = vmatprep.subr.mxu0 0.0
    %911 = vmatpush1.msra.mxu0 0.0
    %912 = vmatprep.subr.mxu0 0.0
    %913 = vmatpush1.msra.mxu0 0.0
    %914 = vmatprep.subr.mxu0 0.0
    %915 = vmatpush1.msra.mxu0 0.0
    %916 = vmatprep.subr.mxu0 0.0
    %917 = vmatpush1.msra.mxu0 0.0
    %918 = vmatprep.subr.mxu0 0.0
    %919 = vmatpush1.msra.mxu0 0.0
    %920 = vmatprep.subr.mxu0 0.0
    %921 = vmatpush1.msra.mxu0 0.0
    %922 = vmatprep.subr.mxu0 0.0
    %923 = vmatpush1.msra.mxu0 0.0
    %924 = vmatprep.subr.mxu0 0.0
    %925 = vmatpush1.msra.mxu0 0.0
    %926 = vmatprep.subr.mxu0 0.0
    %927 = vmatpush1.msra.mxu0 %v896
    %928 = vmatprep.subr.mxu0 0.0
    %929 = vmatpush1.msra.mxu0 %v882
    %930 = vmatprep.subr.mxu0 0.0
    %931 = vmatpush2.msra.mxu0 0.0
    %932 = vmatprep.subr.mxu0 0.0
    %933 = vmatpush2.msra.mxu0 0.0
    %934 = vmatprep.subr.mxu0 0.0
    %935 = vmatpush2.msra.mxu0 0.0
    %936 = vmatprep.subr.mxu0 0.0
    %937 = vmatpush2.msra.mxu0 0.0
    %938 = vmatprep.subr.mxu0 0.0
    %939 = vmatpush2.msra.mxu0 0.0
    %940 = vmatprep.subr.mxu0 0.0
    %941 = vmatpush2.msra.mxu0 0.0
    %942 = vmatprep.subr.mxu0 0.0
    %943 = vmatpush2.msra.mxu0 0.0
    %944 = vmatprep.subr.mxu0 0.0
    %945 = vmatpush2.msra.mxu0 0.0
    %946 = vmatprep.subr.mxu0 0.0
    %947 = vmatpush2.msra.mxu0 0.0
    %948 = vmatprep.subr.mxu0 0.0
    %949 = vmatpush2.msra.mxu0 0.0
    %950 = vmatprep.subr.mxu0 0.0
    %951 = vmatpush2.msra.mxu0 0.0
    %952 = vmatprep.subr.mxu0 0.0
    %953 = vmatpush2.msra.mxu0 0.0
    %954 = vmatprep.subr.mxu0 0.0
    %955 = vmatpush2.msra.mxu0 0.0
    %956 = vmatprep.subr.mxu0 0.0
    %957 = vmatpush2.msra.mxu0 0.0
    %958 = vmatprep.subr.mxu0 0.0
    %959 = vmatpush2.msra.mxu0 0.0
    %960 = vmatprep.subr.mxu0 0.0
    %961 = vmatpush2.msra.mxu0 0.0
    %962 = vmatprep.mubr.f32.mxu0 0.0
    %963 = vmatmul.mubr.f32.gmra.mxu0 %v892
    %v964 = vpop.f32.mrf.mxu0
    %v965 = vadd.f32 %v888, %v964
    %v966 = vpop.f32.mrf.mxu0
    %967 = vdwg.mxu0
    %v968 = vld [vmem:[#allocation6 + $0x108] sm:$0x1]
    %v969 = vld [vmem:[#allocation6 + $0x110] sm:$0x1]
    %v970 = vsel %vm267, %v965, 0.0
    %v971 = vrot.slane %v970, 4
    %v972 = vadd.f32 %v970, %v971
    %v973 = vrot.slane %v972, 2
    %v974 = vadd.f32 %v972, %v973
    %v975 = vrot.slane %v974, 1
    %v976 = vadd.f32 %v974, %v975
    %v977 = vmul.f32 %v976, %v144
    %v978 = vmul.f32 %v965, %v965
    %v979 = vsel %vm267, %v978, 0.0
    %v980 = vrot.slane %v979, 4
    %v981 = vadd.f32 %v979, %v980
    %v982 = vrot.slane %v981, 2
    %v983 = vadd.f32 %v981, %v982
    %v984 = vrot.slane %v983, 1
    %v985 = vadd.f32 %v983, %v984
    %v986 = vmul.f32 %v985, %v144
    %v987 = vmul.f32 %v977, %v977
    %v988 = vsub.f32 %v986, %v987
    %v989 = vadd.f32 %v988, 1e-05
    %v990 = vrsqrt.pop %v989
    %v991 = vmul.f32 %v968, %v990
    %v992 = vsub.f32 %v965, %v977
    %v993 = vlaneseq
    %v994 = vshrl.u32 %v993, 7
    %v995 = vsub.s32 0, %v994
    %v996 = vrot.slane %v991, %v995
    %v997 = vmul.f32 %v992, %v996
    %v998 = vlaneseq
    %v999 = vshrl.u32 %v998, 7
    %v1000 = vsub.s32 0, %v999
    %v1001 = vrot.slane %v969, %v1000
    %v1002 = vadd.f32 %v997, %v1001
    %vm1003 = vcmp.ge.f32.partialorder %v1002, 0.0
    %v1004 = vmul.f32 %v1002, 0.1
    %v1005 = vsel %vm1003, %v1002, %v1004
    %v1006 = vld [vmem:[#allocation6 + $0x118] sm:$0xff]
    %v1007 = vld [vmem:[#allocation6 + $0x120] sm:$0xff]
    %v1008 = vld [vmem:[#allocation6 + $0x128] sm:$0xff]
    %v1009 = vld [vmem:[#allocation6 + $0x130] sm:$0x1]
    %v1010 = vlaneseq
    %v1011 = vshrl.u32 %v1010, 7
    %v1012 = vsub.s32 0, %v1011
    %v1013 = vrot.slane %v1009, %v1012
    %v1015 = vsel %vm267, %v1005, 0
    %1017 = vmatprep.subr.mxu0 0.0
    %1018 = vmatpush1.msra.mxu0 0.0
    %1019 = vmatprep.subr.mxu0 0.0
    %1020 = vmatpush1.msra.mxu0 0.0
    %1021 = vmatprep.subr.mxu0 0.0
    %1022 = vmatpush1.msra.mxu0 0.0
    %1023 = vmatprep.subr.mxu0 0.0
    %1024 = vmatpush1.msra.mxu0 0.0
    %1025 = vmatprep.subr.mxu0 0.0
    %1026 = vmatpush1.msra.mxu0 0.0
    %1027 = vmatprep.subr.mxu0 0.0
    %1028 = vmatpush1.msra.mxu0 0.0
    %1029 = vmatprep.subr.mxu0 0.0
    %1030 = vmatpush1.msra.mxu0 0.0
    %1031 = vmatprep.subr.mxu0 0.0
    %1032 = vmatpush1.msra.mxu0 0.0
    %1033 = vmatprep.subr.mxu0 0.0
    %1034 = vmatpush1.msra.mxu0 0.0
    %1035 = vmatprep.subr.mxu0 0.0
    %1036 = vmatpush1.msra.mxu0 0.0
    %1037 = vmatprep.subr.mxu0 0.0
    %1038 = vmatpush1.msra.mxu0 0.0
    %1039 = vmatprep.subr.mxu0 0.0
    %1040 = vmatpush1.msra.mxu0 0.0
    %1041 = vmatprep.subr.mxu0 0.0
    %1042 = vmatpush1.msra.mxu0 0.0
    %1043 = vmatprep.subr.mxu0 0.0
    %1044 = vmatpush1.msra.mxu0 %v1008
    %1045 = vmatprep.subr.mxu0 0.0
    %1046 = vmatpush1.msra.mxu0 %v1007
    %1047 = vmatprep.subr.mxu0 0.0
    %1048 = vmatpush1.msra.mxu0 %v1006
    %1049 = vmatprep.subr.mxu0 0.0
    %1050 = vmatpush2.msra.mxu0 0.0
    %1051 = vmatprep.subr.mxu0 0.0
    %1052 = vmatpush2.msra.mxu0 0.0
    %1053 = vmatprep.subr.mxu0 0.0
    %1054 = vmatpush2.msra.mxu0 0.0
    %1055 = vmatprep.subr.mxu0 0.0
    %1056 = vmatpush2.msra.mxu0 0.0
    %1057 = vmatprep.subr.mxu0 0.0
    %1058 = vmatpush2.msra.mxu0 0.0
    %1059 = vmatprep.subr.mxu0 0.0
    %1060 = vmatpush2.msra.mxu0 0.0
    %1061 = vmatprep.subr.mxu0 0.0
    %1062 = vmatpush2.msra.mxu0 0.0
    %1063 = vmatprep.subr.mxu0 0.0
    %1064 = vmatpush2.msra.mxu0 0.0
    %1065 = vmatprep.subr.mxu0 0.0
    %1066 = vmatpush2.msra.mxu0 0.0
    %1067 = vmatprep.subr.mxu0 0.0
    %1068 = vmatpush2.msra.mxu0 0.0
    %1069 = vmatprep.subr.mxu0 0.0
    %1070 = vmatpush2.msra.mxu0 0.0
    %1071 = vmatprep.subr.mxu0 0.0
    %1072 = vmatpush2.msra.mxu0 0.0
    %1073 = vmatprep.subr.mxu0 0.0
    %1074 = vmatpush2.msra.mxu0 0.0
    %1075 = vmatprep.subr.mxu0 0.0
    %1076 = vmatpush2.msra.mxu0 0.0
    %1077 = vmatprep.subr.mxu0 0.0
    %1078 = vmatpush2.msra.mxu0 0.0
    %1079 = vmatprep.subr.mxu0 0.0
    %1080 = vmatpush2.msra.mxu0 0.0
    %1081 = vmatprep.mubr.f32.mxu0 0.0
    %1082 = vmatmul.mubr.f32.gmra.mxu0 %v1015
    %v1083 = vpop.f32.mrf.mxu0
    %v1084 = vadd.f32 %v1013, %v1083
    %v1085 = vpop.f32.mrf.mxu0
    %1086 = vdwg.mxu0
    %v1087 = vmax.f32 %v1084, 0.0
    %v1088 = vand.u32 2147483647, %v1084
    %v1089 = vsub.f32 0.0, %v1088
    %v1090 = vmul.f32 %v1089, 1.442695
    %v1091 = vpow.pop %v1090
    %v1092 = vadd.f32 %v1091, 1.0
    %v1093 = vlog2.pop %v1092
    %v1094 = vmul.f32 %v1093, 0.6931472
    %v1095 = vadd.f32 %v1087, %v1094
    %v1096 = vadd.f32 %v264, 1e-08
    %v1097 = vadd.f32 %v1095, 1e-08
    %1099 = vrot.lane.b32.xlu0 %v1097, 24
    %v1100 = vpop.permute.xlu0 %1099
    %v1102 = vadd.f32 %v1096, %v1100
    %v1103 = vrcp.pop %v1102
    %v1104 = vmul.f32 %v1096, %v1100
    %v1105 = vmul.f32 %v1104, %v1103
    %1106 = vrot.lane.b32.xlu0 %v1097, 8
    %v1107 = vpop.permute.xlu0 %1106
    %v1109 = vmul.f32 %v253, %v1107
    %1111 = vrot.lane.b32.xlu0 %v1096, 88
    %v1112 = vpop.permute.xlu0 %1111
    %v1114 = vmul.f32 %v1084, %v1112
    %1116 = vrot.lane.b32.xlu0 %v1114, 24
    %v1117 = vpop.permute.xlu0 %1116
    %v1119 = vadd.f32 %v1109, %v1117
    %1121 = vrot.lane.b32.xlu0 %v1103, 112
    %v1122 = vpop.permute.xlu0 %1121
    %v1124 = vmul.f32 %v1119, %v1122
    %v1125 = vrsqrt.pop %v1105
    %v1126 = vmul.f32 %v1105, %v1125
    %vm1127 = vcmp.eq.f32.partialorder %v1105, inf
    %v1128 = vsel %vm1127, %v1105, %v1126
    %vm1129 = vcmp.eq.f32.partialorder %v1105, 0.0
    %v1130 = vand.u32 %v1105, 2147483648
    %v1131 = vsel %vm1129, %v1130, %v1128
    %1133 = vrot.lane.b32.xlu0 %v1131, 108
    %v1134 = vpop.permute.xlu0 %1133
    %v1136 = vmul.f32 %v522, %v1134
    %1138 = vrot.lane.b32.xlu0 %v1136, 4
    %v1139 = vpop.permute.xlu0 %1138
    %v1141 = vadd.f32 %v1124, %v1139
    %v1142 = vadd.f32 %v1105, 1e-08
    %v1143 = vlog2.pop %v1142
    %v1144 = vmul.f32 %v1143, 0.6931472
    %v1145 = vmul.f32 %v1144, 0.5
    %v1146 = vsub.f32 -0.9189385, %v1145
    %v1147 = vsub.f32 %v1141, %v1124
    %v1148 = vmul.f32 %v1147, %v1147
    %v1149 = vmul.f32 %v1105, 2.0
    %v1150 = vadd.f32 %v1149, 1e-08
    %1152 = vrot.lane.b32.xlu0 %v1150, 112
    %v1153 = vpop.permute.xlu0 %1152
    %v1155 = vrcp.pop %v1153
    %v1156 = vmul.f32 %v1148, %v1155
    %1158 = vrot.lane.b32.xlu0 %v1156, 16
    %v1159 = vpop.permute.xlu0 %1158
    %v1161 = vsub.f32 %v1146, %v1159
    %1163 = vrot.lane.b32.xlu0 %v1161, 88
    %v1164 = vpop.permute.xlu0 %1163
    %v1166 = vsel %vm396, %v1164, 0.0
    %1167 = vadd.xlane.f32.xlu0 %v1166
    %v1168 = vpop.xlane.xlu0 %1167
    %v1169 = vlog2.pop %v1097
    %v1170 = vmul.f32 %v1169, 0.6931472
    %v1171 = vmul.f32 %v1170, 0.5
    %v1172 = vsub.f32 -0.9189385, %v1171
    %1174 = vrot.lane.b32.xlu0 %v1084, 24
    %v1175 = vpop.permute.xlu0 %1174
    %v1177 = vsub.f32 %v1141, %v1175
    %v1178 = vmul.f32 %v1177, %v1177
    %v1179 = vmul.f32 %v1095, 2.0
    %v1180 = vadd.f32 %v1179, 1e-08
    %1182 = vrot.lane.b32.xlu0 %v1180, 8
    %v1183 = vpop.permute.xlu0 %1182
    %v1185 = vrcp.pop %v1183
    %v1186 = vmul.f32 %v1178, %v1185
    %1188 = vrot.lane.b32.xlu0 %v1186, 120
    %v1189 = vpop.permute.xlu0 %1188
    %v1191 = vsub.f32 %v1172, %v1189
    %1193 = vrot.lane.b32.xlu0 %v1191, 112
    %v1194 = vpop.permute.xlu0 %1193
    %v1196 = vsel %vm396, %v1194, 0.0
    %1197 = vadd.xlane.f32.xlu0 %v1196
    %v1198 = vpop.xlane.xlu0 %1197
    %v1199 = vsub.f32 %v1168, %v1198
    %v1200 = vld [vmem:[#allocation6 + $0x138] sm:$0xff]
    %v1201 = vld [vmem:[#allocation6 + $0x140] sm:$0xff]
    %v1202 = vld [vmem:[#allocation6 + $0x148] sm:$0x1]
    %v1203 = vlaneseq
    %v1204 = vshrl.u32 %v1203, 7
    %v1205 = vsub.s32 0, %v1204
    %v1206 = vrot.slane %v1202, %v1205
    %1208 = vrot.lane.b32.xlu0 %v1141, 104
    %v1209 = vpop.permute.xlu0 %1208
    %v1210 = vsel %vm396, %v1209, 0
    %1212 = vmatprep.subr.mxu0 0.0
    %1213 = vmatpush1.msra.mxu0 0.0
    %1214 = vmatprep.subr.mxu0 0.0
    %1215 = vmatpush1.msra.mxu0 0.0
    %1216 = vmatprep.subr.mxu0 0.0
    %1217 = vmatpush1.msra.mxu0 0.0
    %1218 = vmatprep.subr.mxu0 0.0
    %1219 = vmatpush1.msra.mxu0 0.0
    %1220 = vmatprep.subr.mxu0 0.0
    %1221 = vmatpush1.msra.mxu0 0.0
    %1222 = vmatprep.subr.mxu0 0.0
    %1223 = vmatpush1.msra.mxu0 0.0
    %1224 = vmatprep.subr.mxu0 0.0
    %1225 = vmatpush1.msra.mxu0 0.0
    %1226 = vmatprep.subr.mxu0 0.0
    %1227 = vmatpush1.msra.mxu0 0.0
    %1228 = vmatprep.subr.mxu0 0.0
    %1229 = vmatpush1.msra.mxu0 0.0
    %1230 = vmatprep.subr.mxu0 0.0
    %1231 = vmatpush1.msra.mxu0 0.0
    %1232 = vmatprep.subr.mxu0 0.0
    %1233 = vmatpush1.msra.mxu0 0.0
    %1234 = vmatprep.subr.mxu0 0.0
    %1235 = vmatpush1.msra.mxu0 0.0
    %1236 = vmatprep.subr.mxu0 0.0
    %1237 = vmatpush1.msra.mxu0 0.0
    %1238 = vmatprep.subr.mxu0 0.0
    %1239 = vmatpush1.msra.mxu0 0.0
    %1240 = vmatprep.subr.mxu0 0.0
    %1241 = vmatpush1.msra.mxu0 %v1201
    %1242 = vmatprep.subr.mxu0 0.0
    %1243 = vmatpush1.msra.mxu0 %v1200
    %1244 = vmatprep.subr.mxu0 0.0
    %1245 = vmatpush2.msra.mxu0 0.0
    %1246 = vmatprep.subr.mxu0 0.0
    %1247 = vmatpush2.msra.mxu0 0.0
    %1248 = vmatprep.subr.mxu0 0.0
    %1249 = vmatpush2.msra.mxu0 0.0
    %1250 = vmatprep.subr.mxu0 0.0
    %1251 = vmatpush2.msra.mxu0 0.0
    %1252 = vmatprep.subr.mxu0 0.0
    %1253 = vmatpush2.msra.mxu0 0.0
    %1254 = vmatprep.subr.mxu0 0.0
    %1255 = vmatpush2.msra.mxu0 0.0
    %1256 = vmatprep.subr.mxu0 0.0
    %1257 = vmatpush2.msra.mxu0 0.0
    %1258 = vmatprep.subr.mxu0 0.0
    %1259 = vmatpush2.msra.mxu0 0.0
    %1260 = vmatprep.subr.mxu0 0.0
    %1261 = vmatpush2.msra.mxu0 0.0
    %1262 = vmatprep.subr.mxu0 0.0
    %1263 = vmatpush2.msra.mxu0 0.0
    %1264 = vmatprep.subr.mxu0 0.0
    %1265 = vmatpush2.msra.mxu0 0.0
    %1266 = vmatprep.subr.mxu0 0.0
    %1267 = vmatpush2.msra.mxu0 0.0
    %1268 = vmatprep.subr.mxu0 0.0
    %1269 = vmatpush2.msra.mxu0 0.0
    %1270 = vmatprep.subr.mxu0 0.0
    %1271 = vmatpush2.msra.mxu0 0.0
    %1272 = vmatprep.subr.mxu0 0.0
    %1273 = vmatpush2.msra.mxu0 0.0
    %1274 = vmatprep.subr.mxu0 0.0
    %1275 = vmatpush2.msra.mxu0 0.0
    %1276 = vmatprep.mubr.f32.mxu0 0.0
    %1277 = vmatmul.mubr.f32.gmra.mxu0 %v1210
    %v1278 = vpop.f32.mrf.mxu0
    %v1279 = vadd.f32 %v1206, %v1278
    %v1280 = vpop.f32.mrf.mxu0
    %1281 = vdwg.mxu0
    %v1282 = vmax.f32 %v1279, 0.0
    %v1283 = vld [vmem:[#allocation6 + $0x150] sm:$0xff]
    %v1284 = vld [vmem:[#allocation6 + $0x158] sm:$0xff]
    %v1285 = vld [vmem:[#allocation6 + $0x160] sm:$0xff]
    %v1286 = vld [vmem:[#allocation6 + $0x168] sm:$0xff]
    %v1287 = vld [vmem:[#allocation6 + $0x170] sm:$0x1]
    %v1288 = vlaneseq
    %v1289 = vshrl.u32 %v1288, 7
    %v1290 = vsub.s32 0, %v1289
    %v1291 = vrot.slane %v1287, %v1290
    %v1293 = vsel %vm61, %v1282, 0
    %1295 = vmatprep.subr.mxu0 0.0
    %1296 = vmatpush1.msra.mxu0 0.0
    %1297 = vmatprep.subr.mxu0 0.0
    %1298 = vmatpush1.msra.mxu0 0.0
    %1299 = vmatprep.subr.mxu0 0.0
    %1300 = vmatpush1.msra.mxu0 0.0
    %1301 = vmatprep.subr.mxu0 0.0
    %1302 = vmatpush1.msra.mxu0 0.0
    %1303 = vmatprep.subr.mxu0 0.0
    %1304 = vmatpush1.msra.mxu0 0.0
    %1305 = vmatprep.subr.mxu0 0.0
    %1306 = vmatpush1.msra.mxu0 0.0
    %1307 = vmatprep.subr.mxu0 0.0
    %1308 = vmatpush1.msra.mxu0 0.0
    %1309 = vmatprep.subr.mxu0 0.0
    %1310 = vmatpush1.msra.mxu0 0.0
    %1311 = vmatprep.subr.mxu0 0.0
    %1312 = vmatpush1.msra.mxu0 0.0
    %1313 = vmatprep.subr.mxu0 0.0
    %1314 = vmatpush1.msra.mxu0 0.0
    %1315 = vmatprep.subr.mxu0 0.0
    %1316 = vmatpush1.msra.mxu0 0.0
    %1317 = vmatprep.subr.mxu0 0.0
    %1318 = vmatpush1.msra.mxu0 0.0
    %1319 = vmatprep.subr.mxu0 0.0
    %1320 = vmatpush1.msra.mxu0 %v1286
    %1321 = vmatprep.subr.mxu0 0.0
    %1322 = vmatpush1.msra.mxu0 %v1285
    %1323 = vmatprep.subr.mxu0 0.0
    %1324 = vmatpush1.msra.mxu0 %v1284
    %1325 = vmatprep.subr.mxu0 0.0
    %1326 = vmatpush1.msra.mxu0 %v1283
    %1327 = vmatprep.subr.mxu0 0.0
    %1328 = vmatpush2.msra.mxu0 0.0
    %1329 = vmatprep.subr.mxu0 0.0
    %1330 = vmatpush2.msra.mxu0 0.0
    %1331 = vmatprep.subr.mxu0 0.0
    %1332 = vmatpush2.msra.mxu0 0.0
    %1333 = vmatprep.subr.mxu0 0.0
    %1334 = vmatpush2.msra.mxu0 0.0
    %1335 = vmatprep.subr.mxu0 0.0
    %1336 = vmatpush2.msra.mxu0 0.0
    %1337 = vmatprep.subr.mxu0 0.0
    %1338 = vmatpush2.msra.mxu0 0.0
    %1339 = vmatprep.subr.mxu0 0.0
    %1340 = vmatpush2.msra.mxu0 0.0
    %1341 = vmatprep.subr.mxu0 0.0
    %1342 = vmatpush2.msra.mxu0 0.0
    %1343 = vmatprep.subr.mxu0 0.0
    %1344 = vmatpush2.msra.mxu0 0.0
    %1345 = vmatprep.subr.mxu0 0.0
    %1346 = vmatpush2.msra.mxu0 0.0
    %1347 = vmatprep.subr.mxu0 0.0
    %1348 = vmatpush2.msra.mxu0 0.0
    %1349 = vmatprep.subr.mxu0 0.0
    %1350 = vmatpush2.msra.mxu0 0.0
    %1351 = vmatprep.subr.mxu0 0.0
    %1352 = vmatpush2.msra.mxu0 0.0
    %1353 = vmatprep.subr.mxu0 0.0
    %1354 = vmatpush2.msra.mxu0 0.0
    %1355 = vmatprep.subr.mxu0 0.0
    %1356 = vmatpush2.msra.mxu0 0.0
    %1357 = vmatprep.subr.mxu0 0.0
    %1358 = vmatpush2.msra.mxu0 0.0
    %1359 = vmatprep.mubr.f32.mxu0 0.0
    %1360 = vmatmul.mubr.f32.gmra.mxu0 %v1293
    %v1361 = vpop.f32.mrf.mxu0
    %v1362 = vadd.f32 %v1291, %v1361
    %v1363 = vpop.f32.mrf.mxu0
    %1364 = vdwg.mxu0
    %v1365 = vmul.f32 %v1362, 0.5
    %v1366 = vtanh.pop %v1365
    %v1367 = vadd.f32 %v1366, 1.0
    %v1368 = vmul.f32 %v1367, 0.5
    %v1369 = vadd.f32 %v570, %v881
    %v1370 = vadd.f32 %v1369, %v1199
    %v1371 = vrot.slane %v570, 4
    %v1372 = vadd.f32 %v570, %v1371
    %v1373 = vrot.slane %v1372, 2
    %v1374 = vadd.f32 %v1372, %v1373
    %v1375 = vrot.slane %v1374, 1
    %v1376 = vadd.f32 %v1374, %v1375
    %v1377 = vrot.slane %v881, 4
    %v1378 = vadd.f32 %v881, %v1377
    %v1379 = vrot.slane %v1378, 2
    %v1380 = vadd.f32 %v1378, %v1379
    %v1381 = vrot.slane %v1380, 1
    %v1382 = vadd.f32 %v1380, %v1381
    %v1383 = vrot.slane %v1199, 4
    %v1384 = vadd.f32 %v1199, %v1383
    %v1385 = vrot.slane %v1384, 2
    %v1386 = vadd.f32 %v1384, %v1385
    %v1387 = vrot.slane %v1386, 1
    %v1388 = vadd.f32 %v1386, %v1387
    %1389 = vrot.lane.b32.xlu0 %v535, 32
    %v1390 = vpop.permute.xlu0 %1389
    %1392 = vrot.lane.b32.xlu0 %v822, 24
    %v1393 = vpop.permute.xlu0 %1392
    %1395 = vrot.lane.b32.xlu0 %v1141, 28
    %v1396 = vpop.permute.xlu0 %1395
    %v1398 = vsel %vm61, %v1368, %v1390
    %vm1399 = vcmask 326656
    %v1400 = vsel %vm1399, %v1398, %v1393
    %vm1401 = vcmask 424960
    %v1402 = vsel %vm1401, %v1400, %v1396
    %vm1403 = vcmask 556032
    %v1404 = vsel %vm1403, %v1402, %v1370
    %vm1405 = vcmask 564224
    %v1406 = vsel %vm1405, %v1404, %v1376
    %vm1407 = vcmask 572416
    %v1408 = vsel %vm1407, %v1406, %v1382
    %vm1409 = vcmask 580608
    %v1410 = vsel %vm1409, %v1408, %v1388
    %vm1411 = vcmask 588800
    %v1412 = vsel %vm1411, %v1410, 0.0
    %1413 = vst [vmem:[%s3] sm:$0xff] %v1412
    // Predicated region
    $region26: #{forward.1} parent=1 // pred_check
      _
    $region27: #{forward.1} parent=1 // pred_check_branch
      %1415 = sbr.rel (0) target = $region29
    $region28: #{forward.1} parent=1 // pred_region
      _
    $region29: #{forward.1} parent=1 // pred_fallthru
      _
    // Predicated region
    $region30: #{forward.1} parent=1 // pred_check
      _
    $region31: #{forward.1} parent=1 // pred_check_branch
      %1417 = sbr.rel (0) target = $region33
    $region32: #{forward.1} parent=1 // pred_region
      _
    $region33: #{forward.1} parent=1 // pred_fallthru
      _
    %1418 = vsyncpa [#allocation3], 1
    %1419 = vsyncpa [#allocation5], 1

</llo_original>
